<compile_context>
chip_gen: v6e
topology: v6e:2x2x1
jax: 0.10.0
libtpu: 0.0.40
codegen_flags: <defaults>
</compile_context>

<pallas_src>
import functools
import math

import jax
import jax.numpy as jnp
from jax.experimental import pallas as pl
from jax.experimental.pallas import tpu as pltpu


# ----------------------------------------------------------------------------
# Fused self_block kernel (one batch element per grid step)
# ----------------------------------------------------------------------------

def _self_block_kernel(x_ref,
                       wq_ref, bq_ref, wk_ref, bk_ref, wv_ref, bv_ref,
                       fcw_ref, fcb_ref, ln1g_ref, ln1b_ref,
                       w1_ref, b1_ref, w2_ref, b2_ref, ln2g_ref, ln2b_ref,
                       out_ref, attn_ref,
                       *, n_head, d_k, d_v, scale):
    f32 = jnp.float32

    def mm(a, b):
        # Plain x @ W on the MXU with f32 accumulation (weights pre-transposed
        # in the wrapper, so no in-kernel transposes).
        return jax.lax.dot_general(a, b, (((1,), (0,)), ((), ())),
                                   preferred_element_type=f32)

    def layer_norm(h, g, b, eps=1e-5):
        mu = jnp.mean(h, axis=-1, keepdims=True)
        var = jnp.mean(jnp.square(h - mu), axis=-1, keepdims=True)
        return (h - mu) * jax.lax.rsqrt(var + eps) * g + b

    x = x_ref[0].astype(f32)                                        # (L, d_model)

    # ---- QKV projections (fused into the kernel) ----
    q = mm(x, wq_ref[...].astype(f32)) + bq_ref[...].astype(f32)    # (L, H*d_k)
    k = mm(x, wk_ref[...].astype(f32)) + bk_ref[...].astype(f32)    # (L, H*d_k)
    v = mm(x, wv_ref[...].astype(f32)) + bv_ref[...].astype(f32)    # (L, H*d_v)

    fcw = fcw_ref[...].astype(f32)                                  # (H*d_v, d_model)

    # ---- per-head attention + accumulated fc projection ----
    proj = None
    for h in range(n_head):                                         # static unroll (n_head small)
        qh = q[:, h * d_k:(h + 1) * d_k] * scale                    # fold 1/temperature into q
        kh = k[:, h * d_k:(h + 1) * d_k]
        vh = v[:, h * d_v:(h + 1) * d_v]
        # scores: contract the shared head dim directly (no k transpose).
        s = jax.lax.dot_general(qh, kh, (((1,), (1,)), ((), ())),
                                preferred_element_type=f32)         # (L, L)
        m = jnp.max(s, axis=-1, keepdims=True)
        e = jnp.exp(s - m)
        p = e / jnp.sum(e, axis=-1, keepdims=True)                  # exact softmax
        attn_ref[h, 0] = p.astype(attn_ref.dtype)
        ctx_h = mm(p, vh)                                           # (L, d_v)
        # fc(concat_h ctx_h) == sum_h ctx_h @ fcw[h*d_v:(h+1)*d_v, :]
        part = mm(ctx_h, fcw[h * d_v:(h + 1) * d_v, :])             # (L, d_model)
        proj = part if proj is None else proj + part

    proj = proj + fcb_ref[...].astype(f32)
    y1 = layer_norm(proj + x, ln1g_ref[...].astype(f32), ln1b_ref[...].astype(f32))

    # ---- PositionwiseFeedForward: Conv1d(kernel=1) == pointwise linear ----
    hid = jnp.maximum(mm(y1, w1_ref[...].astype(f32)) + b1_ref[...].astype(f32), 0.0)
    y2 = mm(hid, w2_ref[...].astype(f32)) + b2_ref[...].astype(f32)
    out = layer_norm(y2 + y1, ln2g_ref[...].astype(f32), ln2b_ref[...].astype(f32))

    out_ref[0] = out.astype(out_ref.dtype)


def _pick_vmem_limit_bytes():
    """Generation-aware scoped-VMEM limit (v5e/v6e: 128 MiB physical, v7x: 64 MiB)."""
    try:
        cap = pltpu.get_tpu_info().vmem_capacity_bytes
    except Exception:
        cap = 128 * 1024 * 1024
    return int(min(64 * 1024 * 1024, max(16 * 1024 * 1024, cap // 2)))


def self_block_pallas(params, enc_input, n_head, d_k, d_v, *, attn_dtype=None):
    """Fused eval-mode self_block forward. Returns (enc_output, attn).

    enc_output: (B, L, d_model); attn: (n_head * B, L, L) (head-major, like PyTorch).
    """
    B, L, d_model = enc_input.shape
    d_inner = params["ffn_w1_w"].shape[0]
    dtype = enc_input.dtype
    if attn_dtype is None:
        attn_dtype = dtype

    # Pre-transpose weights so every in-kernel matmul is x @ W; biases / LN
    # params reshaped to (1, N) 2-D for TPU-friendly layouts.
    wq = params["w_qs_w"].T;  bq = params["w_qs_b"].reshape(1, -1)
    wk = params["w_ks_w"].T;  bk = params["w_ks_b"].reshape(1, -1)
    wv = params["w_vs_w"].T;  bv = params["w_vs_b"].reshape(1, -1)
    fcw = params["fc_w"].T;   fcb = params["fc_b"].reshape(1, -1)
    ln1g = params["ln1_g"].reshape(1, -1); ln1b = params["ln1_b"].reshape(1, -1)
    w1 = params["ffn_w1_w"].T; b1 = params["ffn_w1_b"].reshape(1, -1)
    w2 = params["ffn_w2_w"].T; b2 = params["ffn_w2_b"].reshape(1, -1)
    ln2g = params["ln2_g"].reshape(1, -1); ln2b = params["ln2_b"].reshape(1, -1)
    weights = (wq, bq, wk, bk, wv, bv, fcw, fcb, ln1g, ln1b, w1, b1, w2, b2, ln2g, ln2b)

    def full_spec(arr):
        nd = arr.ndim
        return pl.BlockSpec(arr.shape, lambda b, _nd=nd: (0,) * _nd)

    in_specs = [pl.BlockSpec((1, L, d_model), lambda b: (b, 0, 0))]
    in_specs += [full_spec(a) for a in weights]

    out_specs = (
        pl.BlockSpec((1, L, d_model), lambda b: (b, 0, 0)),
        pl.BlockSpec((n_head, 1, L, L), lambda b: (0, b, 0, 0)),
    )
    out_shape = (
        jax.ShapeDtypeStruct((B, L, d_model), dtype),
        jax.ShapeDtypeStruct((n_head, B, L, L), attn_dtype),
    )

    # Advisory cost estimate so XLA schedules/overlaps the custom call.
    hdk, hdv = n_head * d_k, n_head * d_v
    itm = jnp.dtype(dtype).itemsize
    attn_itm = jnp.dtype(attn_dtype).itemsize
    flops = B * (2 * L * d_model * (2 * hdk + hdv)
                 + n_head * 2 * L * L * (d_k + d_v)
                 + 2 * L * hdv * d_model
                 + 2 * L * d_model * d_inner
                 + 2 * L * d_inner * d_model)
    param_bytes = sum(int(a.size) * a.dtype.itemsize for a in weights)
    cost = pl.CostEstimate(
        flops=int(flops),
        transcendentals=int(B * (n_head * L * L + 4 * L)),
        bytes_accessed=int(enc_input.size * itm + param_bytes
                           + B * L * d_model * itm
                           + n_head * B * L * L * attn_itm),
    )

    kernel = functools.partial(_self_block_kernel, n_head=n_head, d_k=d_k,
                               d_v=d_v, scale=1.0 / (float(d_k) ** 0.5))

    out, attn = pl.pallas_call(
        kernel,
        out_shape=out_shape,
        grid_spec=pltpu.PrefetchScalarGridSpec(
            num_scalar_prefetch=0,
            grid=(B,),
            in_specs=in_specs,
            out_specs=out_specs,
        ),
        compiler_params=pltpu.CompilerParams(
            dimension_semantics=("parallel",),
            vmem_limit_bytes=_pick_vmem_limit_bytes(),
        ),
        cost_estimate=cost,
    )(enc_input, *weights)

    # Head-major (n_head, B, L, L) -> (n_head*B, L, L), matching PyTorch layout.
    return out, attn.reshape(n_head * B, L, L)


# ----------------------------------------------------------------------------
# Pure-JAX reference (eval mode) and parameter init
# ----------------------------------------------------------------------------

def _layer_norm(x, gamma, beta, eps=1e-5):
    mean = jnp.mean(x, axis=-1, keepdims=True)
    var = jnp.mean(jnp.square(x - mean), axis=-1, keepdims=True)
    return (x - mean) * jax.lax.rsqrt(var + eps) * gamma + beta


def self_block_reference(params, enc_input, n_head, d_k, d_v):
    hp = jax.lax.Precision.HIGHEST
    B, L, d_model = enc_input.shape
    residual = enc_input

    q = jnp.dot(enc_input, params["w_qs_w"].T, precision=hp) + params["w_qs_b"]
    k = jnp.dot(enc_input, params["w_ks_w"].T, precision=hp) + params["w_ks_b"]
    v = jnp.dot(enc_input, params["w_vs_w"].T, precision=hp) + params["w_vs_b"]

    def split_heads(t, d):
        t = t.reshape(B, L, n_head, d)
        return jnp.transpose(t, (2, 0, 1, 3)).reshape(n_head * B, L, d)

    q = split_heads(q, d_k); k = split_heads(k, d_k); v = split_heads(v, d_v)

    temperature = float(d_k) ** 0.5
    scores = jnp.einsum("bqd,bkd->bqk", q, k, precision=hp) / temperature
    attn = jax.nn.softmax(scores, axis=-1)
    ctx = jnp.einsum("bqk,bkd->bqd", attn, v, precision=hp)

    ctx = ctx.reshape(n_head, B, L, d_v)
    ctx = jnp.transpose(ctx, (1, 2, 0, 3)).reshape(B, L, n_head * d_v)
    proj = jnp.dot(ctx, params["fc_w"].T, precision=hp) + params["fc_b"]
    y1 = _layer_norm(proj + residual, params["ln1_g"], params["ln1_b"])

    hid = jax.nn.relu(jnp.dot(y1, params["ffn_w1_w"].T, precision=hp) + params["ffn_w1_b"])
    y2 = jnp.dot(hid, params["ffn_w2_w"].T, precision=hp) + params["ffn_w2_b"]
    out = _layer_norm(y2 + y1, params["ln2_g"], params["ln2_b"])
    return out, attn


def init_self_block_params(key, d_model, d_inner, n_head, d_k, d_v,
                           dtype=jnp.float32):
    ks = jax.random.split(key, 12)

    def w(key, out_dim, in_dim, std):
        return jax.random.normal(key, (out_dim, in_dim), dtype) * std

    def b(key, dim):
        return jax.random.normal(key, (dim,), dtype) * 0.02

    return dict(
        w_qs_w=w(ks[0], n_head * d_k, d_model, math.sqrt(2.0 / (d_model + d_k))),
        w_qs_b=b(ks[1], n_head * d_k),
        w_ks_w=w(ks[2], n_head * d_k, d_model, math.sqrt(2.0 / (d_model + d_k))),
        w_ks_b=b(ks[3], n_head * d_k),
        w_vs_w=w(ks[4], n_head * d_v, d_model, math.sqrt(2.0 / (d_model + d_v))),
        w_vs_b=b(ks[5], n_head * d_v),
        fc_w=w(ks[6], d_model, n_head * d_v, math.sqrt(2.0 / (d_model + n_head * d_v))),
        fc_b=b(ks[7], d_model),
        ln1_g=jnp.ones((d_model,), dtype), ln1_b=jnp.zeros((d_model,), dtype),
        ffn_w1_w=w(ks[8], d_inner, d_model, math.sqrt(2.0 / (d_model + d_inner))),
        ffn_w1_b=b(ks[9], d_inner),
        ffn_w2_w=w(ks[10], d_model, d_inner, math.sqrt(2.0 / (d_model + d_inner))),
        ffn_w2_b=b(ks[11], d_model),
        ln2_g=jnp.ones((d_model,), dtype), ln2_b=jnp.zeros((d_model,), dtype),
    )


# ----------------------------------------------------------------------------
# Test
# ----------------------------------------------------------------------------

if __name__ == "__main__":
    key = jax.random.PRNGKey(0)
    k_params, k_input = jax.random.split(key)

    sz_b, seq_len = 2, 8
    d_model, d_inner, n_head, d_k, d_v = 32, 64, 4, 16, 16

    params = init_self_block_params(k_params, d_model, d_inner, n_head, d_k, d_v)
    enc_input = jax.random.normal(k_input, (sz_b, seq_len, d_model), dtype=jnp.float32)

    fwd = jax.jit(lambda p, x: self_block_pallas(p, x, n_head, d_k, d_v))
    out, attn = fwd(params, enc_input)
    out = jax.block_until_ready(out)
    attn = jax.block_until_ready(attn)

    ref_fwd = jax.jit(lambda p, x: self_block_reference(p, x, n_head, d_k, d_v))
    ref_out, ref_attn = ref_fwd(params, enc_input)
    ref_out = jax.block_until_ready(ref_out)
    ref_attn = jax.block_until_ready(ref_attn)

    assert out.shape == ref_out.shape == (sz_b, seq_len, d_model)
    assert attn.shape == ref_attn.shape == (n_head * sz_b, seq_len, seq_len)

    # Tolerances cover TPU DEFAULT-precision (bf16-pass) f32 matmuls in either
    # path (XLA reference / interpret-mode kernel); on compiled TPU hardware the
    # kernel's f32 MXU passes match the HIGHEST-precision reference to ~1e-5.
    attn_err = float(jnp.max(jnp.abs(attn - ref_attn)))
    out_err = float(jnp.max(jnp.abs(out - ref_out)))
    assert jnp.allclose(attn, ref_attn, atol=2e-2, rtol=2e-2), attn_err
    assert jnp.allclose(out, ref_out, atol=3e-2, rtol=3e-2), out_err

    print("KERNEL_OK")
</pallas_src>

<mosaic_0001>
module attributes {stable_mosaic.version = 11 : i64} {
  func.func @_self_block_kernel(%arg0: i32, %arg1: memref<1x8x32xf32, #tpu.memory_space<vmem>>, %arg2: memref<32x64xf32, #tpu.memory_space<vmem>>, %arg3: memref<1x64xf32, #tpu.memory_space<vmem>>, %arg4: memref<32x64xf32, #tpu.memory_space<vmem>>, %arg5: memref<1x64xf32, #tpu.memory_space<vmem>>, %arg6: memref<32x64xf32, #tpu.memory_space<vmem>>, %arg7: memref<1x64xf32, #tpu.memory_space<vmem>>, %arg8: memref<64x32xf32, #tpu.memory_space<vmem>>, %arg9: memref<1x32xf32, #tpu.memory_space<vmem>>, %arg10: memref<1x32xf32, #tpu.memory_space<vmem>>, %arg11: memref<1x32xf32, #tpu.memory_space<vmem>>, %arg12: memref<32x64xf32, #tpu.memory_space<vmem>>, %arg13: memref<1x64xf32, #tpu.memory_space<vmem>>, %arg14: memref<64x32xf32, #tpu.memory_space<vmem>>, %arg15: memref<1x32xf32, #tpu.memory_space<vmem>>, %arg16: memref<1x32xf32, #tpu.memory_space<vmem>>, %arg17: memref<1x32xf32, #tpu.memory_space<vmem>>, %arg18: memref<1x8x32xf32, #tpu.memory_space<vmem>>, %arg19: memref<4x1x8x8xf32, #tpu.memory_space<vmem>>) attributes {dimension_semantics = [#tpu.dimension_semantics<parallel>], iteration_bounds = array<i64: 2>, scalar_prefetch = 0 : i64, scratch_operands = 0 : i64, tpu.core_type = #tpu.core_type<tc>, window_params = [{transform_indices = @transform_0, window_bounds = array<i64: 1, 8, 32>}, {pipeline_mode = #tpu.pipeline_mode<synchronous>, transform_indices = @transform_1, window_bounds = array<i64: 32, 64>}, {pipeline_mode = #tpu.pipeline_mode<synchronous>, transform_indices = @transform_2, window_bounds = array<i64: 1, 64>}, {pipeline_mode = #tpu.pipeline_mode<synchronous>, transform_indices = @transform_3, window_bounds = array<i64: 32, 64>}, {pipeline_mode = #tpu.pipeline_mode<synchronous>, transform_indices = @transform_4, window_bounds = array<i64: 1, 64>}, {pipeline_mode = #tpu.pipeline_mode<synchronous>, transform_indices = @transform_5, window_bounds = array<i64: 32, 64>}, {pipeline_mode = #tpu.pipeline_mode<synchronous>, transform_indices = @transform_6, window_bounds = array<i64: 1, 64>}, {pipeline_mode = #tpu.pipeline_mode<synchronous>, transform_indices = @transform_7, window_bounds = array<i64: 64, 32>}, {pipeline_mode = #tpu.pipeline_mode<synchronous>, transform_indices = @transform_8, window_bounds = array<i64: 1, 32>}, {pipeline_mode = #tpu.pipeline_mode<synchronous>, transform_indices = @transform_9, window_bounds = array<i64: 1, 32>}, {pipeline_mode = #tpu.pipeline_mode<synchronous>, transform_indices = @transform_10, window_bounds = array<i64: 1, 32>}, {pipeline_mode = #tpu.pipeline_mode<synchronous>, transform_indices = @transform_11, window_bounds = array<i64: 32, 64>}, {pipeline_mode = #tpu.pipeline_mode<synchronous>, transform_indices = @transform_12, window_bounds = array<i64: 1, 64>}, {pipeline_mode = #tpu.pipeline_mode<synchronous>, transform_indices = @transform_13, window_bounds = array<i64: 64, 32>}, {pipeline_mode = #tpu.pipeline_mode<synchronous>, transform_indices = @transform_14, window_bounds = array<i64: 1, 32>}, {pipeline_mode = #tpu.pipeline_mode<synchronous>, transform_indices = @transform_15, window_bounds = array<i64: 1, 32>}, {pipeline_mode = #tpu.pipeline_mode<synchronous>, transform_indices = @transform_16, window_bounds = array<i64: 1, 32>}, {transform_indices = @transform_17, window_bounds = array<i64: 1, 8, 32>}, {transform_indices = @transform_18, window_bounds = array<i64: 4, 1, 8, 8>}]} {
    %c0 = arith.constant 0 : index
    %c0_0 = arith.constant 0 : index
    %c0_1 = arith.constant 0 : index
    %0 = vector.load %arg1[%c0, %c0_0, %c0_1] : memref<1x8x32xf32, #tpu.memory_space<vmem>>, vector<1x8x32xf32>
    %1 = vector.shape_cast %0 : vector<1x8x32xf32> to vector<8x32xf32>
    %c0_2 = arith.constant 0 : index
    %c0_3 = arith.constant 0 : index
    %2 = vector.load %arg2[%c0_2, %c0_3] : memref<32x64xf32, #tpu.memory_space<vmem>>, vector<32x64xf32>
    %cst = arith.constant dense<0.000000e+00> : vector<8x64xf32>
    %3 = tpu.matmul %1, %2, %cst {dimension_numbers = #tpu.dot_dimension_numbers<[1], [0], [0], [1], [0, 0, 1, 1], [], []>} : vector<8x32xf32>, vector<32x64xf32>, vector<8x64xf32> -> vector<8x64xf32>
    %c0_4 = arith.constant 0 : index
    %c0_5 = arith.constant 0 : index
    %4 = vector.load %arg3[%c0_4, %c0_5] : memref<1x64xf32, #tpu.memory_space<vmem>>, vector<1x64xf32>
    %5 = vector.broadcast %4 : vector<1x64xf32> to vector<8x64xf32>
    %6 = arith.addf %3, %5 : vector<8x64xf32>
    %c0_6 = arith.constant 0 : index
    %c0_7 = arith.constant 0 : index
    %7 = vector.load %arg4[%c0_6, %c0_7] : memref<32x64xf32, #tpu.memory_space<vmem>>, vector<32x64xf32>
    %cst_8 = arith.constant dense<0.000000e+00> : vector<8x64xf32>
    %8 = tpu.matmul %1, %7, %cst_8 {dimension_numbers = #tpu.dot_dimension_numbers<[1], [0], [0], [1], [0, 0, 1, 1], [], []>} : vector<8x32xf32>, vector<32x64xf32>, vector<8x64xf32> -> vector<8x64xf32>
    %c0_9 = arith.constant 0 : index
    %c0_10 = arith.constant 0 : index
    %9 = vector.load %arg5[%c0_9, %c0_10] : memref<1x64xf32, #tpu.memory_space<vmem>>, vector<1x64xf32>
    %10 = vector.broadcast %9 : vector<1x64xf32> to vector<8x64xf32>
    %11 = arith.addf %8, %10 : vector<8x64xf32>
    %c0_11 = arith.constant 0 : index
    %c0_12 = arith.constant 0 : index
    %12 = vector.load %arg6[%c0_11, %c0_12] : memref<32x64xf32, #tpu.memory_space<vmem>>, vector<32x64xf32>
    %cst_13 = arith.constant dense<0.000000e+00> : vector<8x64xf32>
    %13 = tpu.matmul %1, %12, %cst_13 {dimension_numbers = #tpu.dot_dimension_numbers<[1], [0], [0], [1], [0, 0, 1, 1], [], []>} : vector<8x32xf32>, vector<32x64xf32>, vector<8x64xf32> -> vector<8x64xf32>
    %c0_14 = arith.constant 0 : index
    %c0_15 = arith.constant 0 : index
    %14 = vector.load %arg7[%c0_14, %c0_15] : memref<1x64xf32, #tpu.memory_space<vmem>>, vector<1x64xf32>
    %15 = vector.broadcast %14 : vector<1x64xf32> to vector<8x64xf32>
    %16 = arith.addf %13, %15 : vector<8x64xf32>
    %c0_16 = arith.constant 0 : index
    %c0_17 = arith.constant 0 : index
    %17 = vector.load %arg8[%c0_16, %c0_17] : memref<64x32xf32, #tpu.memory_space<vmem>>, vector<64x32xf32>
    %18 = vector.extract_strided_slice %6 {offsets = [0, 0], sizes = [8, 16], strides = [1, 1]} : vector<8x64xf32> to vector<8x16xf32>
    %cst_18 = arith.constant 2.500000e-01 : f32
    %19 = vector.broadcast %cst_18 : f32 to vector<8x16xf32>
    %20 = arith.mulf %18, %19 : vector<8x16xf32>
    %21 = vector.extract_strided_slice %11 {offsets = [0, 0], sizes = [8, 16], strides = [1, 1]} : vector<8x64xf32> to vector<8x16xf32>
    %22 = vector.extract_strided_slice %16 {offsets = [0, 0], sizes = [8, 16], strides = [1, 1]} : vector<8x64xf32> to vector<8x16xf32>
    %cst_19 = arith.constant dense<0.000000e+00> : vector<8x8xf32>
    %23 = tpu.matmul %20, %21, %cst_19 {dimension_numbers = #tpu.dot_dimension_numbers<[1], [1], [0], [0], [0, 0, 1, 0], [], []>} : vector<8x16xf32>, vector<8x16xf32>, vector<8x8xf32> -> vector<8x8xf32>
    %cst_20 = arith.constant dense<0xFF800000> : vector<8xf32>
    %24 = vector.multi_reduction <maximumf>, %23, %cst_20 [1] : vector<8x8xf32> to vector<8xf32>
    %25 = vector.shape_cast %24 : vector<8xf32> to vector<8x1xf32>
    %26 = vector.broadcast %25 : vector<8x1xf32> to vector<8x8xf32>
    %27 = arith.subf %23, %26 : vector<8x8xf32>
    %28 = math.exp %27 : vector<8x8xf32>
    %cst_21 = arith.constant dense<0.000000e+00> : vector<8xf32>
    %29 = vector.multi_reduction <add>, %28, %cst_21 [1] : vector<8x8xf32> to vector<8xf32>
    %30 = vector.shape_cast %29 : vector<8xf32> to vector<8x1xf32>
    %31 = vector.broadcast %30 : vector<8x1xf32> to vector<8x8xf32>
    %32 = arith.divf %28, %31 : vector<8x8xf32>
    %c0_22 = arith.constant 0 : index
    %c0_23 = arith.constant 0 : index
    %c0_24 = arith.constant 0 : index
    %c0_25 = arith.constant 0 : index
    %33 = vector.load %arg19[%c0_22, %c0_23, %c0_24, %c0_25] : memref<4x1x8x8xf32, #tpu.memory_space<vmem>>, vector<1x1x8x8xf32>
    %34 = vector.shape_cast %33 : vector<1x1x8x8xf32> to vector<8x8xf32>
    %35 = vector.shape_cast %32 : vector<8x8xf32> to vector<1x1x8x8xf32>
    tpu.vector_store %arg19[%c0_22, %c0_23, %c0_24, %c0_25], %35 {strides = array<i32>} : memref<4x1x8x8xf32, #tpu.memory_space<vmem>>, vector<1x1x8x8xf32>,
    %cst_26 = arith.constant dense<0.000000e+00> : vector<8x16xf32>
    %36 = tpu.matmul %32, %22, %cst_26 {dimension_numbers = #tpu.dot_dimension_numbers<[1], [0], [0], [1], [0, 0, 1, 1], [], []>} : vector<8x8xf32>, vector<8x16xf32>, vector<8x16xf32> -> vector<8x16xf32>
    %37 = vector.extract_strided_slice %17 {offsets = [0, 0], sizes = [16, 32], strides = [1, 1]} : vector<64x32xf32> to vector<16x32xf32>
    %cst_27 = arith.constant dense<0.000000e+00> : vector<8x32xf32>
    %38 = tpu.matmul %36, %37, %cst_27 {dimension_numbers = #tpu.dot_dimension_numbers<[1], [0], [0], [1], [0, 0, 1, 1], [], []>} : vector<8x16xf32>, vector<16x32xf32>, vector<8x32xf32> -> vector<8x32xf32>
    %39 = vector.extract_strided_slice %6 {offsets = [0, 16], sizes = [8, 16], strides = [1, 1]} : vector<8x64xf32> to vector<8x16xf32>
    %cst_28 = arith.constant 2.500000e-01 : f32
    %40 = vector.broadcast %cst_28 : f32 to vector<8x16xf32>
    %41 = arith.mulf %39, %40 : vector<8x16xf32>
    %42 = vector.extract_strided_slice %11 {offsets = [0, 16], sizes = [8, 16], strides = [1, 1]} : vector<8x64xf32> to vector<8x16xf32>
    %43 = vector.extract_strided_slice %16 {offsets = [0, 16], sizes = [8, 16], strides = [1, 1]} : vector<8x64xf32> to vector<8x16xf32>
    %cst_29 = arith.constant dense<0.000000e+00> : vector<8x8xf32>
    %44 = tpu.matmul %41, %42, %cst_29 {dimension_numbers = #tpu.dot_dimension_numbers<[1], [1], [0], [0], [0, 0, 1, 0], [], []>} : vector<8x16xf32>, vector<8x16xf32>, vector<8x8xf32> -> vector<8x8xf32>
    %cst_30 = arith.constant dense<0xFF800000> : vector<8xf32>
    %45 = vector.multi_reduction <maximumf>, %44, %cst_30 [1] : vector<8x8xf32> to vector<8xf32>
    %46 = vector.shape_cast %45 : vector<8xf32> to vector<8x1xf32>
    %47 = vector.broadcast %46 : vector<8x1xf32> to vector<8x8xf32>
    %48 = arith.subf %44, %47 : vector<8x8xf32>
    %49 = math.exp %48 : vector<8x8xf32>
    %cst_31 = arith.constant dense<0.000000e+00> : vector<8xf32>
    %50 = vector.multi_reduction <add>, %49, %cst_31 [1] : vector<8x8xf32> to vector<8xf32>
    %51 = vector.shape_cast %50 : vector<8xf32> to vector<8x1xf32>
    %52 = vector.broadcast %51 : vector<8x1xf32> to vector<8x8xf32>
    %53 = arith.divf %49, %52 : vector<8x8xf32>
    %c1 = arith.constant 1 : index
    %c0_32 = arith.constant 0 : index
    %c0_33 = arith.constant 0 : index
    %c0_34 = arith.constant 0 : index
    %54 = vector.load %arg19[%c1, %c0_32, %c0_33, %c0_34] : memref<4x1x8x8xf32, #tpu.memory_space<vmem>>, vector<1x1x8x8xf32>
    %55 = vector.shape_cast %54 : vector<1x1x8x8xf32> to vector<8x8xf32>
    %56 = vector.shape_cast %53 : vector<8x8xf32> to vector<1x1x8x8xf32>
    tpu.vector_store %arg19[%c1, %c0_32, %c0_33, %c0_34], %56 {strides = array<i32>} : memref<4x1x8x8xf32, #tpu.memory_space<vmem>>, vector<1x1x8x8xf32>,
    %cst_35 = arith.constant dense<0.000000e+00> : vector<8x16xf32>
    %57 = tpu.matmul %53, %43, %cst_35 {dimension_numbers = #tpu.dot_dimension_numbers<[1], [0], [0], [1], [0, 0, 1, 1], [], []>} : vector<8x8xf32>, vector<8x16xf32>, vector<8x16xf32> -> vector<8x16xf32>
    %58 = vector.extract_strided_slice %17 {offsets = [16, 0], sizes = [16, 32], strides = [1, 1]} : vector<64x32xf32> to vector<16x32xf32>
    %cst_36 = arith.constant dense<0.000000e+00> : vector<8x32xf32>
    %59 = tpu.matmul %57, %58, %cst_36 {dimension_numbers = #tpu.dot_dimension_numbers<[1], [0], [0], [1], [0, 0, 1, 1], [], []>} : vector<8x16xf32>, vector<16x32xf32>, vector<8x32xf32> -> vector<8x32xf32>
    %60 = arith.addf %38, %59 : vector<8x32xf32>
    %61 = vector.extract_strided_slice %6 {offsets = [0, 32], sizes = [8, 16], strides = [1, 1]} : vector<8x64xf32> to vector<8x16xf32>
    %cst_37 = arith.constant 2.500000e-01 : f32
    %62 = vector.broadcast %cst_37 : f32 to vector<8x16xf32>
    %63 = arith.mulf %61, %62 : vector<8x16xf32>
    %64 = vector.extract_strided_slice %11 {offsets = [0, 32], sizes = [8, 16], strides = [1, 1]} : vector<8x64xf32> to vector<8x16xf32>
    %65 = vector.extract_strided_slice %16 {offsets = [0, 32], sizes = [8, 16], strides = [1, 1]} : vector<8x64xf32> to vector<8x16xf32>
    %cst_38 = arith.constant dense<0.000000e+00> : vector<8x8xf32>
    %66 = tpu.matmul %63, %64, %cst_38 {dimension_numbers = #tpu.dot_dimension_numbers<[1], [1], [0], [0], [0, 0, 1, 0], [], []>} : vector<8x16xf32>, vector<8x16xf32>, vector<8x8xf32> -> vector<8x8xf32>
    %cst_39 = arith.constant dense<0xFF800000> : vector<8xf32>
    %67 = vector.multi_reduction <maximumf>, %66, %cst_39 [1] : vector<8x8xf32> to vector<8xf32>
    %68 = vector.shape_cast %67 : vector<8xf32> to vector<8x1xf32>
    %69 = vector.broadcast %68 : vector<8x1xf32> to vector<8x8xf32>
    %70 = arith.subf %66, %69 : vector<8x8xf32>
    %71 = math.exp %70 : vector<8x8xf32>
    %cst_40 = arith.constant dense<0.000000e+00> : vector<8xf32>
    %72 = vector.multi_reduction <add>, %71, %cst_40 [1] : vector<8x8xf32> to vector<8xf32>
    %73 = vector.shape_cast %72 : vector<8xf32> to vector<8x1xf32>
    %74 = vector.broadcast %73 : vector<8x1xf32> to vector<8x8xf32>
    %75 = arith.divf %71, %74 : vector<8x8xf32>
    %c2 = arith.constant 2 : index
    %c0_41 = arith.constant 0 : index
    %c0_42 = arith.constant 0 : index
    %c0_43 = arith.constant 0 : index
    %76 = vector.load %arg19[%c2, %c0_41, %c0_42, %c0_43] : memref<4x1x8x8xf32, #tpu.memory_space<vmem>>, vector<1x1x8x8xf32>
    %77 = vector.shape_cast %76 : vector<1x1x8x8xf32> to vector<8x8xf32>
    %78 = vector.shape_cast %75 : vector<8x8xf32> to vector<1x1x8x8xf32>
    tpu.vector_store %arg19[%c2, %c0_41, %c0_42, %c0_43], %78 {strides = array<i32>} : memref<4x1x8x8xf32, #tpu.memory_space<vmem>>, vector<1x1x8x8xf32>,
    %cst_44 = arith.constant dense<0.000000e+00> : vector<8x16xf32>
    %79 = tpu.matmul %75, %65, %cst_44 {dimension_numbers = #tpu.dot_dimension_numbers<[1], [0], [0], [1], [0, 0, 1, 1], [], []>} : vector<8x8xf32>, vector<8x16xf32>, vector<8x16xf32> -> vector<8x16xf32>
    %80 = vector.extract_strided_slice %17 {offsets = [32, 0], sizes = [16, 32], strides = [1, 1]} : vector<64x32xf32> to vector<16x32xf32>
    %cst_45 = arith.constant dense<0.000000e+00> : vector<8x32xf32>
    %81 = tpu.matmul %79, %80, %cst_45 {dimension_numbers = #tpu.dot_dimension_numbers<[1], [0], [0], [1], [0, 0, 1, 1], [], []>} : vector<8x16xf32>, vector<16x32xf32>, vector<8x32xf32> -> vector<8x32xf32>
    %82 = arith.addf %60, %81 : vector<8x32xf32>
    %83 = vector.extract_strided_slice %6 {offsets = [0, 48], sizes = [8, 16], strides = [1, 1]} : vector<8x64xf32> to vector<8x16xf32>
    %cst_46 = arith.constant 2.500000e-01 : f32
    %84 = vector.broadcast %cst_46 : f32 to vector<8x16xf32>
    %85 = arith.mulf %83, %84 : vector<8x16xf32>
    %86 = vector.extract_strided_slice %11 {offsets = [0, 48], sizes = [8, 16], strides = [1, 1]} : vector<8x64xf32> to vector<8x16xf32>
    %87 = vector.extract_strided_slice %16 {offsets = [0, 48], sizes = [8, 16], strides = [1, 1]} : vector<8x64xf32> to vector<8x16xf32>
    %cst_47 = arith.constant dense<0.000000e+00> : vector<8x8xf32>
    %88 = tpu.matmul %85, %86, %cst_47 {dimension_numbers = #tpu.dot_dimension_numbers<[1], [1], [0], [0], [0, 0, 1, 0], [], []>} : vector<8x16xf32>, vector<8x16xf32>, vector<8x8xf32> -> vector<8x8xf32>
    %cst_48 = arith.constant dense<0xFF800000> : vector<8xf32>
    %89 = vector.multi_reduction <maximumf>, %88, %cst_48 [1] : vector<8x8xf32> to vector<8xf32>
    %90 = vector.shape_cast %89 : vector<8xf32> to vector<8x1xf32>
    %91 = vector.broadcast %90 : vector<8x1xf32> to vector<8x8xf32>
    %92 = arith.subf %88, %91 : vector<8x8xf32>
    %93 = math.exp %92 : vector<8x8xf32>
    %cst_49 = arith.constant dense<0.000000e+00> : vector<8xf32>
    %94 = vector.multi_reduction <add>, %93, %cst_49 [1] : vector<8x8xf32> to vector<8xf32>
    %95 = vector.shape_cast %94 : vector<8xf32> to vector<8x1xf32>
    %96 = vector.broadcast %95 : vector<8x1xf32> to vector<8x8xf32>
    %97 = arith.divf %93, %96 : vector<8x8xf32>
    %c3 = arith.constant 3 : index
    %c0_50 = arith.constant 0 : index
    %c0_51 = arith.constant 0 : index
    %c0_52 = arith.constant 0 : index
    %98 = vector.load %arg19[%c3, %c0_50, %c0_51, %c0_52] : memref<4x1x8x8xf32, #tpu.memory_space<vmem>>, vector<1x1x8x8xf32>
    %99 = vector.shape_cast %98 : vector<1x1x8x8xf32> to vector<8x8xf32>
    %100 = vector.shape_cast %97 : vector<8x8xf32> to vector<1x1x8x8xf32>
    tpu.vector_store %arg19[%c3, %c0_50, %c0_51, %c0_52], %100 {strides = array<i32>} : memref<4x1x8x8xf32, #tpu.memory_space<vmem>>, vector<1x1x8x8xf32>,
    %cst_53 = arith.constant dense<0.000000e+00> : vector<8x16xf32>
    %101 = tpu.matmul %97, %87, %cst_53 {dimension_numbers = #tpu.dot_dimension_numbers<[1], [0], [0], [1], [0, 0, 1, 1], [], []>} : vector<8x8xf32>, vector<8x16xf32>, vector<8x16xf32> -> vector<8x16xf32>
    %102 = vector.extract_strided_slice %17 {offsets = [48, 0], sizes = [16, 32], strides = [1, 1]} : vector<64x32xf32> to vector<16x32xf32>
    %cst_54 = arith.constant dense<0.000000e+00> : vector<8x32xf32>
    %103 = tpu.matmul %101, %102, %cst_54 {dimension_numbers = #tpu.dot_dimension_numbers<[1], [0], [0], [1], [0, 0, 1, 1], [], []>} : vector<8x16xf32>, vector<16x32xf32>, vector<8x32xf32> -> vector<8x32xf32>
    %104 = arith.addf %82, %103 : vector<8x32xf32>
    %c0_55 = arith.constant 0 : index
    %c0_56 = arith.constant 0 : index
    %105 = vector.load %arg9[%c0_55, %c0_56] : memref<1x32xf32, #tpu.memory_space<vmem>>, vector<1x32xf32>
    %106 = vector.broadcast %105 : vector<1x32xf32> to vector<8x32xf32>
    %107 = arith.addf %104, %106 : vector<8x32xf32>
    %108 = arith.addf %107, %1 : vector<8x32xf32>
    %c0_57 = arith.constant 0 : index
    %c0_58 = arith.constant 0 : index
    %109 = vector.load %arg10[%c0_57, %c0_58] : memref<1x32xf32, #tpu.memory_space<vmem>>, vector<1x32xf32>
    %c0_59 = arith.constant 0 : index
    %c0_60 = arith.constant 0 : index
    %110 = vector.load %arg11[%c0_59, %c0_60] : memref<1x32xf32, #tpu.memory_space<vmem>>, vector<1x32xf32>
    %cst_61 = arith.constant dense<0.000000e+00> : vector<8xf32>
    %111 = vector.multi_reduction <add>, %108, %cst_61 [1] : vector<8x32xf32> to vector<8xf32>
    %112 = vector.shape_cast %111 : vector<8xf32> to vector<8x1xf32>
    %cst_62 = arith.constant 3.200000e+01 : f32
    %113 = vector.broadcast %cst_62 : f32 to vector<8x1xf32>
    %114 = arith.divf %112, %113 : vector<8x1xf32>
    %115 = vector.broadcast %114 : vector<8x1xf32> to vector<8x32xf32>
    %116 = arith.subf %108, %115 : vector<8x32xf32>
    %117 = arith.mulf %116, %116 : vector<8x32xf32>
    %cst_63 = arith.constant dense<0.000000e+00> : vector<8xf32>
    %118 = vector.multi_reduction <add>, %117, %cst_63 [1] : vector<8x32xf32> to vector<8xf32>
    %119 = vector.shape_cast %118 : vector<8xf32> to vector<8x1xf32>
    %cst_64 = arith.constant 3.200000e+01 : f32
    %120 = vector.broadcast %cst_64 : f32 to vector<8x1xf32>
    %121 = arith.divf %119, %120 : vector<8x1xf32>
    %122 = vector.broadcast %114 : vector<8x1xf32> to vector<8x32xf32>
    %123 = arith.subf %108, %122 : vector<8x32xf32>
    %cst_65 = arith.constant 9.99999974E-6 : f32
    %124 = vector.broadcast %cst_65 : f32 to vector<8x1xf32>
    %125 = arith.addf %121, %124 : vector<8x1xf32>
    %126 = math.rsqrt %125 : vector<8x1xf32>
    %127 = vector.broadcast %126 : vector<8x1xf32> to vector<8x32xf32>
    %128 = arith.mulf %123, %127 : vector<8x32xf32>
    %129 = vector.broadcast %109 : vector<1x32xf32> to vector<8x32xf32>
    %130 = arith.mulf %128, %129 : vector<8x32xf32>
    %131 = vector.broadcast %110 : vector<1x32xf32> to vector<8x32xf32>
    %132 = arith.addf %130, %131 : vector<8x32xf32>
    %c0_66 = arith.constant 0 : index
    %c0_67 = arith.constant 0 : index
    %133 = vector.load %arg12[%c0_66, %c0_67] : memref<32x64xf32, #tpu.memory_space<vmem>>, vector<32x64xf32>
    %cst_68 = arith.constant dense<0.000000e+00> : vector<8x64xf32>
    %134 = tpu.matmul %132, %133, %cst_68 {dimension_numbers = #tpu.dot_dimension_numbers<[1], [0], [0], [1], [0, 0, 1, 1], [], []>} : vector<8x32xf32>, vector<32x64xf32>, vector<8x64xf32> -> vector<8x64xf32>
    %c0_69 = arith.constant 0 : index
    %c0_70 = arith.constant 0 : index
    %135 = vector.load %arg13[%c0_69, %c0_70] : memref<1x64xf32, #tpu.memory_space<vmem>>, vector<1x64xf32>
    %136 = vector.broadcast %135 : vector<1x64xf32> to vector<8x64xf32>
    %137 = arith.addf %134, %136 : vector<8x64xf32>
    %cst_71 = arith.constant 0.000000e+00 : f32
    %138 = vector.broadcast %cst_71 : f32 to vector<8x64xf32>
    %139 = arith.maximumf %137, %138 : vector<8x64xf32>
    %c0_72 = arith.constant 0 : index
    %c0_73 = arith.constant 0 : index
    %140 = vector.load %arg14[%c0_72, %c0_73] : memref<64x32xf32, #tpu.memory_space<vmem>>, vector<64x32xf32>
    %cst_74 = arith.constant dense<0.000000e+00> : vector<8x32xf32>
    %141 = tpu.matmul %139, %140, %cst_74 {dimension_numbers = #tpu.dot_dimension_numbers<[1], [0], [0], [1], [0, 0, 1, 1], [], []>} : vector<8x64xf32>, vector<64x32xf32>, vector<8x32xf32> -> vector<8x32xf32>
    %c0_75 = arith.constant 0 : index
    %c0_76 = arith.constant 0 : index
    %142 = vector.load %arg15[%c0_75, %c0_76] : memref<1x32xf32, #tpu.memory_space<vmem>>, vector<1x32xf32>
    %143 = vector.broadcast %142 : vector<1x32xf32> to vector<8x32xf32>
    %144 = arith.addf %141, %143 : vector<8x32xf32>
    %145 = arith.addf %144, %132 : vector<8x32xf32>
    %c0_77 = arith.constant 0 : index
    %c0_78 = arith.constant 0 : index
    %146 = vector.load %arg16[%c0_77, %c0_78] : memref<1x32xf32, #tpu.memory_space<vmem>>, vector<1x32xf32>
    %c0_79 = arith.constant 0 : index
    %c0_80 = arith.constant 0 : index
    %147 = vector.load %arg17[%c0_79, %c0_80] : memref<1x32xf32, #tpu.memory_space<vmem>>, vector<1x32xf32>
    %cst_81 = arith.constant dense<0.000000e+00> : vector<8xf32>
    %148 = vector.multi_reduction <add>, %145, %cst_81 [1] : vector<8x32xf32> to vector<8xf32>
    %149 = vector.shape_cast %148 : vector<8xf32> to vector<8x1xf32>
    %cst_82 = arith.constant 3.200000e+01 : f32
    %150 = vector.broadcast %cst_82 : f32 to vector<8x1xf32>
    %151 = arith.divf %149, %150 : vector<8x1xf32>
    %152 = vector.broadcast %151 : vector<8x1xf32> to vector<8x32xf32>
    %153 = arith.subf %145, %152 : vector<8x32xf32>
    %154 = arith.mulf %153, %153 : vector<8x32xf32>
    %cst_83 = arith.constant dense<0.000000e+00> : vector<8xf32>
    %155 = vector.multi_reduction <add>, %154, %cst_83 [1] : vector<8x32xf32> to vector<8xf32>
    %156 = vector.shape_cast %155 : vector<8xf32> to vector<8x1xf32>
    %cst_84 = arith.constant 3.200000e+01 : f32
    %157 = vector.broadcast %cst_84 : f32 to vector<8x1xf32>
    %158 = arith.divf %156, %157 : vector<8x1xf32>
    %159 = vector.broadcast %151 : vector<8x1xf32> to vector<8x32xf32>
    %160 = arith.subf %145, %159 : vector<8x32xf32>
    %cst_85 = arith.constant 9.99999974E-6 : f32
    %161 = vector.broadcast %cst_85 : f32 to vector<8x1xf32>
    %162 = arith.addf %158, %161 : vector<8x1xf32>
    %163 = math.rsqrt %162 : vector<8x1xf32>
    %164 = vector.broadcast %163 : vector<8x1xf32> to vector<8x32xf32>
    %165 = arith.mulf %160, %164 : vector<8x32xf32>
    %166 = vector.broadcast %146 : vector<1x32xf32> to vector<8x32xf32>
    %167 = arith.mulf %165, %166 : vector<8x32xf32>
    %168 = vector.broadcast %147 : vector<1x32xf32> to vector<8x32xf32>
    %169 = arith.addf %167, %168 : vector<8x32xf32>
    %c0_86 = arith.constant 0 : index
    %c0_87 = arith.constant 0 : index
    %c0_88 = arith.constant 0 : index
    %170 = vector.load %arg18[%c0_86, %c0_87, %c0_88] : memref<1x8x32xf32, #tpu.memory_space<vmem>>, vector<1x8x32xf32>
    %171 = vector.shape_cast %170 : vector<1x8x32xf32> to vector<8x32xf32>
    %172 = vector.shape_cast %169 : vector<8x32xf32> to vector<1x8x32xf32>
    tpu.vector_store %arg18[%c0_86, %c0_87, %c0_88], %172 {strides = array<i32>} : memref<1x8x32xf32, #tpu.memory_space<vmem>>, vector<1x8x32xf32>,
    return
  }
  func.func @transform_0(%arg0: i32) -> (i32, i32, i32) {
    %c0_i32 = arith.constant 0 : i32
    %c0_i32_0 = arith.constant 0 : i32
    %c0_i32_1 = arith.constant 0 : i32
    return %arg0, %c0_i32, %c0_i32_0 : i32, i32, i32
  }
  func.func @transform_1(%arg0: i32) -> (i32, i32) {
    %c0_i32 = arith.constant 0 : i32
    %c0_i32_0 = arith.constant 0 : i32
    %c0_i32_1 = arith.constant 0 : i32
    return %c0_i32, %c0_i32_0 : i32, i32
  }
  func.func @transform_2(%arg0: i32) -> (i32, i32) {
    %c0_i32 = arith.constant 0 : i32
    %c0_i32_0 = arith.constant 0 : i32
    %c0_i32_1 = arith.constant 0 : i32
    return %c0_i32, %c0_i32_0 : i32, i32
  }
  func.func @transform_3(%arg0: i32) -> (i32, i32) {
    %c0_i32 = arith.constant 0 : i32
    %c0_i32_0 = arith.constant 0 : i32
    %c0_i32_1 = arith.constant 0 : i32
    return %c0_i32, %c0_i32_0 : i32, i32
  }
  func.func @transform_4(%arg0: i32) -> (i32, i32) {
    %c0_i32 = arith.constant 0 : i32
    %c0_i32_0 = arith.constant 0 : i32
    %c0_i32_1 = arith.constant 0 : i32
    return %c0_i32, %c0_i32_0 : i32, i32
  }
  func.func @transform_5(%arg0: i32) -> (i32, i32) {
    %c0_i32 = arith.constant 0 : i32
    %c0_i32_0 = arith.constant 0 : i32
    %c0_i32_1 = arith.constant 0 : i32
    return %c0_i32, %c0_i32_0 : i32, i32
  }
  func.func @transform_6(%arg0: i32) -> (i32, i32) {
    %c0_i32 = arith.constant 0 : i32
    %c0_i32_0 = arith.constant 0 : i32
    %c0_i32_1 = arith.constant 0 : i32
    return %c0_i32, %c0_i32_0 : i32, i32
  }
  func.func @transform_7(%arg0: i32) -> (i32, i32) {
    %c0_i32 = arith.constant 0 : i32
    %c0_i32_0 = arith.constant 0 : i32
    %c0_i32_1 = arith.constant 0 : i32
    return %c0_i32, %c0_i32_0 : i32, i32
  }
  func.func @transform_8(%arg0: i32) -> (i32, i32) {
    %c0_i32 = arith.constant 0 : i32
    %c0_i32_0 = arith.constant 0 : i32
    %c0_i32_1 = arith.constant 0 : i32
    return %c0_i32, %c0_i32_0 : i32, i32
  }
  func.func @transform_9(%arg0: i32) -> (i32, i32) {
    %c0_i32 = arith.constant 0 : i32
    %c0_i32_0 = arith.constant 0 : i32
    %c0_i32_1 = arith.constant 0 : i32
    return %c0_i32, %c0_i32_0 : i32, i32
  }
  func.func @transform_10(%arg0: i32) -> (i32, i32) {
    %c0_i32 = arith.constant 0 : i32
    %c0_i32_0 = arith.constant 0 : i32
    %c0_i32_1 = arith.constant 0 : i32
    return %c0_i32, %c0_i32_0 : i32, i32
  }
  func.func @transform_11(%arg0: i32) -> (i32, i32) {
    %c0_i32 = arith.constant 0 : i32
    %c0_i32_0 = arith.constant 0 : i32
    %c0_i32_1 = arith.constant 0 : i32
    return %c0_i32, %c0_i32_0 : i32, i32
  }
  func.func @transform_12(%arg0: i32) -> (i32, i32) {
    %c0_i32 = arith.constant 0 : i32
    %c0_i32_0 = arith.constant 0 : i32
    %c0_i32_1 = arith.constant 0 : i32
    return %c0_i32, %c0_i32_0 : i32, i32
  }
  func.func @transform_13(%arg0: i32) -> (i32, i32) {
    %c0_i32 = arith.constant 0 : i32
    %c0_i32_0 = arith.constant 0 : i32
    %c0_i32_1 = arith.constant 0 : i32
    return %c0_i32, %c0_i32_0 : i32, i32
  }
  func.func @transform_14(%arg0: i32) -> (i32, i32) {
    %c0_i32 = arith.constant 0 : i32
    %c0_i32_0 = arith.constant 0 : i32
    %c0_i32_1 = arith.constant 0 : i32
    return %c0_i32, %c0_i32_0 : i32, i32
  }
  func.func @transform_15(%arg0: i32) -> (i32, i32) {
    %c0_i32 = arith.constant 0 : i32
    %c0_i32_0 = arith.constant 0 : i32
    %c0_i32_1 = arith.constant 0 : i32
    return %c0_i32, %c0_i32_0 : i32, i32
  }
  func.func @transform_16(%arg0: i32) -> (i32, i32) {
    %c0_i32 = arith.constant 0 : i32
    %c0_i32_0 = arith.constant 0 : i32
    %c0_i32_1 = arith.constant 0 : i32
    return %c0_i32, %c0_i32_0 : i32, i32
  }
  func.func @transform_17(%arg0: i32) -> (i32, i32, i32) {
    %c0_i32 = arith.constant 0 : i32
    %c0_i32_0 = arith.constant 0 : i32
    %c0_i32_1 = arith.constant 0 : i32
    return %arg0, %c0_i32, %c0_i32_0 : i32, i32, i32
  }
  func.func @transform_18(%arg0: i32) -> (i32, i32, i32, i32) {
    %c0_i32 = arith.constant 0 : i32
    %c0_i32_0 = arith.constant 0 : i32
    %c0_i32_1 = arith.constant 0 : i32
    %c0_i32_2 = arith.constant 0 : i32
    return %c0_i32, %arg0, %c0_i32_0, %c0_i32_1 : i32, i32, i32, i32
  }
}

</mosaic_0001>

<llo_original>
// kernel: _lambda_.1
$region0: #{_lambda_.1}
  #allocation0 [shape = 'u32[]', space=smem, size = 0x4, offset = 0x4, fixed_abs, tag = 'smem constant byte address 0x4 - core index']
  #allocation1 [shape = 'u32[144,128]{1,0:T(1,128)}', space=vmem, size = 0x12000, scoped, tag = 'internal scratch']
  %s0 = inlined_call_operand.vmem [shape: f32[2,8,32], index: 0, kind: input, shape index: {}]
  %s1 = inlined_call_operand.vmem [shape: f32[32,64], index: 1, kind: input, shape index: {}]
  %s2 = inlined_call_operand.vmem [shape: f32[1,64], index: 2, kind: input, shape index: {}]
  %s3 = inlined_call_operand.vmem [shape: f32[32,64], index: 3, kind: input, shape index: {}]
  %s4 = inlined_call_operand.vmem [shape: f32[1,64], index: 4, kind: input, shape index: {}]
  %s5 = inlined_call_operand.vmem [shape: f32[32,64], index: 5, kind: input, shape index: {}]
  %s6 = inlined_call_operand.vmem [shape: f32[1,64], index: 6, kind: input, shape index: {}]
  %s7 = inlined_call_operand.vmem [shape: f32[64,32], index: 7, kind: input, shape index: {}]
  %s8 = inlined_call_operand.vmem [shape: f32[1,32], index: 8, kind: input, shape index: {}]
  %s9 = inlined_call_operand.vmem [shape: f32[1,32], index: 9, kind: input, shape index: {}]
  %s10 = inlined_call_operand.vmem [shape: f32[1,32], index: 10, kind: input, shape index: {}]
  %s11 = inlined_call_operand.vmem [shape: f32[32,64], index: 11, kind: input, shape index: {}]
  %s12 = inlined_call_operand.vmem [shape: f32[1,64], index: 12, kind: input, shape index: {}]
  %s13 = inlined_call_operand.vmem [shape: f32[64,32], index: 13, kind: input, shape index: {}]
  %s14 = inlined_call_operand.vmem [shape: f32[1,32], index: 14, kind: input, shape index: {}]
  %s15 = inlined_call_operand.vmem [shape: f32[1,32], index: 15, kind: input, shape index: {}]
  %s16 = inlined_call_operand.vmem [shape: f32[1,32], index: 16, kind: input, shape index: {}]
  %s17 = inlined_call_operand.hbm [shape: f32[2,8,32], index: 17, kind: output, shape index: {0}]
  %s18 = inlined_call_operand.hbm [shape: f32[4,2,8,8], index: 18, kind: output, shape index: {1}]
  %19 = xla_tuple %s17, %s18
  %s20 = sld [smem:[#allocation0]]
  $region109: #{_lambda_.1} parent=0
    _
  %s22 = ssub.s32 1, %s20
  %s23 = scalar_select 0, %s22, %s20
  $region1: #{_lambda_.1} parent=0
    #allocation2 [shape = 'u8[8192]{0}', space=vmem, size = 0x2000, scoped, tag = 'output window, operand 0']
    #allocation3 [shape = 's32[2]{0}', space=sflag, size = 0x8, scoped, tag = 'scoped memory for _lambda_.1']
    #allocation4 [shape = 'u8[32768]{0}', space=vmem, size = 0x8000, scoped, tag = 'output window, operand 1']
    #allocation5 [shape = 's32[2]{0}', space=sflag, size = 0x8, scoped, tag = 'scoped memory for _lambda_.1']
    %24 = vsyncpa [#allocation3], 0
    %s25 = scalar_lea.sflag [#allocation3], 1
    %26 = vsyncpa %s25, 0
    %27 = vsyncpa [#allocation5], 0
    %s28 = scalar_lea.sflag [#allocation5], 1
    %29 = vsyncpa %s28, 0
    loop: start=0, step=1, limit=4
    $region2: #{_lambda_.1} parent=1 // loop_pre_header
      _
    $region3: #{_lambda_.1} parent=1 // loop_header
      %s31 = sphi 0, %s35
      %p32 = scmp.ge.s32.totalorder %s31, 4
      %s41 = sphi 0, %s43
      %s44 = sphi 0, %s41
      %s45 = sphi 0, %s44
      %s61 = sphi 0, %s45
      %s65 = sphi 0, %s65
      %s67 = sphi 0, %s65
      %s68 = sphi 0, %s67
      %s82 = sphi 0, %s68
      %s86 = sphi 0, %s86
      %s88 = sphi 0, %s86
      %s89 = sphi 0, %s88
      %s103 = sphi 0, %s89
      %s107 = sphi 0, %s107
      %s109 = sphi 0, %s107
      %s110 = sphi 0, %s109
      %s124 = sphi 0, %s110
      %s128 = sphi 0, %s128
      %s130 = sphi 0, %s128
      %s131 = sphi 0, %s130
      %s145 = sphi 0, %s131
      %s149 = sphi 0, %s149
      %s151 = sphi 0, %s149
      %s152 = sphi 0, %s151
      %s166 = sphi 0, %s152
      %s170 = sphi 0, %s170
      %s172 = sphi 0, %s170
      %s173 = sphi 0, %s172
      %s187 = sphi 0, %s173
      %s191 = sphi 0, %s191
      %s193 = sphi 0, %s191
      %s194 = sphi 0, %s193
      %s208 = sphi 0, %s194
      %s212 = sphi 0, %s212
      %s214 = sphi 0, %s212
      %s215 = sphi 0, %s214
      %s229 = sphi 0, %s215
      %s233 = sphi 0, %s233
      %s235 = sphi 0, %s233
      %s236 = sphi 0, %s235
      %s250 = sphi 0, %s236
      %s254 = sphi 0, %s254
      %s256 = sphi 0, %s254
      %s257 = sphi 0, %s256
      %s271 = sphi 0, %s257
      %s275 = sphi 0, %s275
      %s277 = sphi 0, %s275
      %s278 = sphi 0, %s277
      %s292 = sphi 0, %s278
      %s296 = sphi 0, %s296
      %s298 = sphi 0, %s296
      %s299 = sphi 0, %s298
      %s313 = sphi 0, %s299
      %s317 = sphi 0, %s317
      %s319 = sphi 0, %s317
      %s320 = sphi 0, %s319
      %s334 = sphi 0, %s320
      %s338 = sphi 0, %s338
      %s340 = sphi 0, %s338
      %s341 = sphi 0, %s340
      %s355 = sphi 0, %s341
      %s359 = sphi 0, %s359
      %s361 = sphi 0, %s359
      %s362 = sphi 0, %s361
      %s376 = sphi 0, %s362
      %s380 = sphi 0, %s380
      %s382 = sphi 0, %s380
      %s383 = sphi 0, %s382
      %s397 = sphi 0, %s383
      %s403 = sphi 0, %s405
      %s406 = sphi 0, %s403
      %s407 = sphi 0, %s406
      %s423 = sphi 0, %s407
      %s429 = sphi 0, %s431
      %s432 = sphi 0, %s429
      %s433 = sphi 0, %s432
      %s449 = sphi 0, %s433
    $region4: #{_lambda_.1} parent=1 // loop_header_branch
      %34 = sbr.rel (%p32) target = $region8
    $region5: #{_lambda_.1} parent=1 // loop_body
      %s36 = ssub.s32 %s31, 1
      %s37 = ssub.s32 %s31, 2
      %s38 = sadd.s32 %s31, 1
      %s39 = ssub.s32 %s31, %s38
      %p40 = scmp.eq.s32.totalorder %s39, 0
      %s42 = sadd.s32 %s41, 1
      %s43 = scalar_select %p40, %s41, %s42
      %p46 = pneg %p40
      %p47 = scmp.eq.s32.totalorder %s31, 1
      %p48 = por %p46, %p47
      %p49 = scmp.ne.s32.totalorder %s41, %s44
      %p50 = scmp.eq.s32.totalorder %s31, 0
      %p51 = por %p49, %p50
      %p52 = scmp.ne.s32.totalorder %s41, %s44
      %p53 = scmp.eq.s32.totalorder %s36, 1
      %p54 = por %p52, %p53
      %p55 = scmp.ne.s32.totalorder %s44, %s45
      %p56 = scmp.eq.s32.totalorder %s36, 0
      %p57 = por %p55, %p56
      %p58 = scmp.ne.s32.totalorder %s44, %s45
      %p59 = scmp.eq.s32.totalorder %s37, 1
      %p60 = por %p58, %p59
      %p62 = scmp.ne.s32.totalorder %s45, %s61
      %p63 = scmp.eq.s32.totalorder %s37, 0
      %p64 = por %p62, %p63
      %s66 = sadd.s32 %s65, 1
      %p69 = scmp.eq.s32.totalorder %s31, 1
      %p70 = scmp.ne.s32.totalorder %s65, %s67
      %p71 = scmp.eq.s32.totalorder %s31, 0
      %p72 = por %p70, %p71
      %p73 = scmp.ne.s32.totalorder %s65, %s67
      %p74 = scmp.eq.s32.totalorder %s36, 1
      %p75 = por %p73, %p74
      %p76 = scmp.ne.s32.totalorder %s67, %s68
      %p77 = scmp.eq.s32.totalorder %s36, 0
      %p78 = por %p76, %p77
      %p79 = scmp.ne.s32.totalorder %s67, %s68
      %p80 = scmp.eq.s32.totalorder %s37, 1
      %p81 = por %p79, %p80
      %p83 = scmp.ne.s32.totalorder %s68, %s82
      %p84 = scmp.eq.s32.totalorder %s37, 0
      %p85 = por %p83, %p84
      %s87 = sadd.s32 %s86, 1
      %p90 = scmp.eq.s32.totalorder %s31, 1
      %p91 = scmp.ne.s32.totalorder %s86, %s88
      %p92 = scmp.eq.s32.totalorder %s31, 0
      %p93 = por %p91, %p92
      %p94 = scmp.ne.s32.totalorder %s86, %s88
      %p95 = scmp.eq.s32.totalorder %s36, 1
      %p96 = por %p94, %p95
      %p97 = scmp.ne.s32.totalorder %s88, %s89
      %p98 = scmp.eq.s32.totalorder %s36, 0
      %p99 = por %p97, %p98
      %p100 = scmp.ne.s32.totalorder %s88, %s89
      %p101 = scmp.eq.s32.totalorder %s37, 1
      %p102 = por %p100, %p101
      %p104 = scmp.ne.s32.totalorder %s89, %s103
      %p105 = scmp.eq.s32.totalorder %s37, 0
      %p106 = por %p104, %p105
      %s108 = sadd.s32 %s107, 1
      %p111 = scmp.eq.s32.totalorder %s31, 1
      %p112 = scmp.ne.s32.totalorder %s107, %s109
      %p113 = scmp.eq.s32.totalorder %s31, 0
      %p114 = por %p112, %p113
      %p115 = scmp.ne.s32.totalorder %s107, %s109
      %p116 = scmp.eq.s32.totalorder %s36, 1
      %p117 = por %p115, %p116
      %p118 = scmp.ne.s32.totalorder %s109, %s110
      %p119 = scmp.eq.s32.totalorder %s36, 0
      %p120 = por %p118, %p119
      %p121 = scmp.ne.s32.totalorder %s109, %s110
      %p122 = scmp.eq.s32.totalorder %s37, 1
      %p123 = por %p121, %p122
      %p125 = scmp.ne.s32.totalorder %s110, %s124
      %p126 = scmp.eq.s32.totalorder %s37, 0
      %p127 = por %p125, %p126
      %s129 = sadd.s32 %s128, 1
      %p132 = scmp.eq.s32.totalorder %s31, 1
      %p133 = scmp.ne.s32.totalorder %s128, %s130
      %p134 = scmp.eq.s32.totalorder %s31, 0
      %p135 = por %p133, %p134
      %p136 = scmp.ne.s32.totalorder %s128, %s130
      %p137 = scmp.eq.s32.totalorder %s36, 1
      %p138 = por %p136, %p137
      %p139 = scmp.ne.s32.totalorder %s130, %s131
      %p140 = scmp.eq.s32.totalorder %s36, 0
      %p141 = por %p139, %p140
      %p142 = scmp.ne.s32.totalorder %s130, %s131
      %p143 = scmp.eq.s32.totalorder %s37, 1
      %p144 = por %p142, %p143
      %p146 = scmp.ne.s32.totalorder %s131, %s145
      %p147 = scmp.eq.s32.totalorder %s37, 0
      %p148 = por %p146, %p147
      %s150 = sadd.s32 %s149, 1
      %p153 = scmp.eq.s32.totalorder %s31, 1
      %p154 = scmp.ne.s32.totalorder %s149, %s151
      %p155 = scmp.eq.s32.totalorder %s31, 0
      %p156 = por %p154, %p155
      %p157 = scmp.ne.s32.totalorder %s149, %s151
      %p158 = scmp.eq.s32.totalorder %s36, 1
      %p159 = por %p157, %p158
      %p160 = scmp.ne.s32.totalorder %s151, %s152
      %p161 = scmp.eq.s32.totalorder %s36, 0
      %p162 = por %p160, %p161
      %p163 = scmp.ne.s32.totalorder %s151, %s152
      %p164 = scmp.eq.s32.totalorder %s37, 1
      %p165 = por %p163, %p164
      %p167 = scmp.ne.s32.totalorder %s152, %s166
      %p168 = scmp.eq.s32.totalorder %s37, 0
      %p169 = por %p167, %p168
      %s171 = sadd.s32 %s170, 1
      %p174 = scmp.eq.s32.totalorder %s31, 1
      %p175 = scmp.ne.s32.totalorder %s170, %s172
      %p176 = scmp.eq.s32.totalorder %s31, 0
      %p177 = por %p175, %p176
      %p178 = scmp.ne.s32.totalorder %s170, %s172
      %p179 = scmp.eq.s32.totalorder %s36, 1
      %p180 = por %p178, %p179
      %p181 = scmp.ne.s32.totalorder %s172, %s173
      %p182 = scmp.eq.s32.totalorder %s36, 0
      %p183 = por %p181, %p182
      %p184 = scmp.ne.s32.totalorder %s172, %s173
      %p185 = scmp.eq.s32.totalorder %s37, 1
      %p186 = por %p184, %p185
      %p188 = scmp.ne.s32.totalorder %s173, %s187
      %p189 = scmp.eq.s32.totalorder %s37, 0
      %p190 = por %p188, %p189
      %s192 = sadd.s32 %s191, 1
      %p195 = scmp.eq.s32.totalorder %s31, 1
      %p196 = scmp.ne.s32.totalorder %s191, %s193
      %p197 = scmp.eq.s32.totalorder %s31, 0
      %p198 = por %p196, %p197
      %p199 = scmp.ne.s32.totalorder %s191, %s193
      %p200 = scmp.eq.s32.totalorder %s36, 1
      %p201 = por %p199, %p200
      %p202 = scmp.ne.s32.totalorder %s193, %s194
      %p203 = scmp.eq.s32.totalorder %s36, 0
      %p204 = por %p202, %p203
      %p205 = scmp.ne.s32.totalorder %s193, %s194
      %p206 = scmp.eq.s32.totalorder %s37, 1
      %p207 = por %p205, %p206
      %p209 = scmp.ne.s32.totalorder %s194, %s208
      %p210 = scmp.eq.s32.totalorder %s37, 0
      %p211 = por %p209, %p210
      %s213 = sadd.s32 %s212, 1
      %p216 = scmp.eq.s32.totalorder %s31, 1
      %p217 = scmp.ne.s32.totalorder %s212, %s214
      %p218 = scmp.eq.s32.totalorder %s31, 0
      %p219 = por %p217, %p218
      %p220 = scmp.ne.s32.totalorder %s212, %s214
      %p221 = scmp.eq.s32.totalorder %s36, 1
      %p222 = por %p220, %p221
      %p223 = scmp.ne.s32.totalorder %s214, %s215
      %p224 = scmp.eq.s32.totalorder %s36, 0
      %p225 = por %p223, %p224
      %p226 = scmp.ne.s32.totalorder %s214, %s215
      %p227 = scmp.eq.s32.totalorder %s37, 1
      %p228 = por %p226, %p227
      %p230 = scmp.ne.s32.totalorder %s215, %s229
      %p231 = scmp.eq.s32.totalorder %s37, 0
      %p232 = por %p230, %p231
      %s234 = sadd.s32 %s233, 1
      %p237 = scmp.eq.s32.totalorder %s31, 1
      %p238 = scmp.ne.s32.totalorder %s233, %s235
      %p239 = scmp.eq.s32.totalorder %s31, 0
      %p240 = por %p238, %p239
      %p241 = scmp.ne.s32.totalorder %s233, %s235
      %p242 = scmp.eq.s32.totalorder %s36, 1
      %p243 = por %p241, %p242
      %p244 = scmp.ne.s32.totalorder %s235, %s236
      %p245 = scmp.eq.s32.totalorder %s36, 0
      %p246 = por %p244, %p245
      %p247 = scmp.ne.s32.totalorder %s235, %s236
      %p248 = scmp.eq.s32.totalorder %s37, 1
      %p249 = por %p247, %p248
      %p251 = scmp.ne.s32.totalorder %s236, %s250
      %p252 = scmp.eq.s32.totalorder %s37, 0
      %p253 = por %p251, %p252
      %s255 = sadd.s32 %s254, 1
      %p258 = scmp.eq.s32.totalorder %s31, 1
      %p259 = scmp.ne.s32.totalorder %s254, %s256
      %p260 = scmp.eq.s32.totalorder %s31, 0
      %p261 = por %p259, %p260
      %p262 = scmp.ne.s32.totalorder %s254, %s256
      %p263 = scmp.eq.s32.totalorder %s36, 1
      %p264 = por %p262, %p263
      %p265 = scmp.ne.s32.totalorder %s256, %s257
      %p266 = scmp.eq.s32.totalorder %s36, 0
      %p267 = por %p265, %p266
      %p268 = scmp.ne.s32.totalorder %s256, %s257
      %p269 = scmp.eq.s32.totalorder %s37, 1
      %p270 = por %p268, %p269
      %p272 = scmp.ne.s32.totalorder %s257, %s271
      %p273 = scmp.eq.s32.totalorder %s37, 0
      %p274 = por %p272, %p273
      %s276 = sadd.s32 %s275, 1
      %p279 = scmp.eq.s32.totalorder %s31, 1
      %p280 = scmp.ne.s32.totalorder %s275, %s277
      %p281 = scmp.eq.s32.totalorder %s31, 0
      %p282 = por %p280, %p281
      %p283 = scmp.ne.s32.totalorder %s275, %s277
      %p284 = scmp.eq.s32.totalorder %s36, 1
      %p285 = por %p283, %p284
      %p286 = scmp.ne.s32.totalorder %s277, %s278
      %p287 = scmp.eq.s32.totalorder %s36, 0
      %p288 = por %p286, %p287
      %p289 = scmp.ne.s32.totalorder %s277, %s278
      %p290 = scmp.eq.s32.totalorder %s37, 1
      %p291 = por %p289, %p290
      %p293 = scmp.ne.s32.totalorder %s278, %s292
      %p294 = scmp.eq.s32.totalorder %s37, 0
      %p295 = por %p293, %p294
      %s297 = sadd.s32 %s296, 1
      %p300 = scmp.eq.s32.totalorder %s31, 1
      %p301 = scmp.ne.s32.totalorder %s296, %s298
      %p302 = scmp.eq.s32.totalorder %s31, 0
      %p303 = por %p301, %p302
      %p304 = scmp.ne.s32.totalorder %s296, %s298
      %p305 = scmp.eq.s32.totalorder %s36, 1
      %p306 = por %p304, %p305
      %p307 = scmp.ne.s32.totalorder %s298, %s299
      %p308 = scmp.eq.s32.totalorder %s36, 0
      %p309 = por %p307, %p308
      %p310 = scmp.ne.s32.totalorder %s298, %s299
      %p311 = scmp.eq.s32.totalorder %s37, 1
      %p312 = por %p310, %p311
      %p314 = scmp.ne.s32.totalorder %s299, %s313
      %p315 = scmp.eq.s32.totalorder %s37, 0
      %p316 = por %p314, %p315
      %s318 = sadd.s32 %s317, 1
      %p321 = scmp.eq.s32.totalorder %s31, 1
      %p322 = scmp.ne.s32.totalorder %s317, %s319
      %p323 = scmp.eq.s32.totalorder %s31, 0
      %p324 = por %p322, %p323
      %p325 = scmp.ne.s32.totalorder %s317, %s319
      %p326 = scmp.eq.s32.totalorder %s36, 1
      %p327 = por %p325, %p326
      %p328 = scmp.ne.s32.totalorder %s319, %s320
      %p329 = scmp.eq.s32.totalorder %s36, 0
      %p330 = por %p328, %p329
      %p331 = scmp.ne.s32.totalorder %s319, %s320
      %p332 = scmp.eq.s32.totalorder %s37, 1
      %p333 = por %p331, %p332
      %p335 = scmp.ne.s32.totalorder %s320, %s334
      %p336 = scmp.eq.s32.totalorder %s37, 0
      %p337 = por %p335, %p336
      %s339 = sadd.s32 %s338, 1
      %p342 = scmp.eq.s32.totalorder %s31, 1
      %p343 = scmp.ne.s32.totalorder %s338, %s340
      %p344 = scmp.eq.s32.totalorder %s31, 0
      %p345 = por %p343, %p344
      %p346 = scmp.ne.s32.totalorder %s338, %s340
      %p347 = scmp.eq.s32.totalorder %s36, 1
      %p348 = por %p346, %p347
      %p349 = scmp.ne.s32.totalorder %s340, %s341
      %p350 = scmp.eq.s32.totalorder %s36, 0
      %p351 = por %p349, %p350
      %p352 = scmp.ne.s32.totalorder %s340, %s341
      %p353 = scmp.eq.s32.totalorder %s37, 1
      %p354 = por %p352, %p353
      %p356 = scmp.ne.s32.totalorder %s341, %s355
      %p357 = scmp.eq.s32.totalorder %s37, 0
      %p358 = por %p356, %p357
      %s360 = sadd.s32 %s359, 1
      %p363 = scmp.eq.s32.totalorder %s31, 1
      %p364 = scmp.ne.s32.totalorder %s359, %s361
      %p365 = scmp.eq.s32.totalorder %s31, 0
      %p366 = por %p364, %p365
      %p367 = scmp.ne.s32.totalorder %s359, %s361
      %p368 = scmp.eq.s32.totalorder %s36, 1
      %p369 = por %p367, %p368
      %p370 = scmp.ne.s32.totalorder %s361, %s362
      %p371 = scmp.eq.s32.totalorder %s36, 0
      %p372 = por %p370, %p371
      %p373 = scmp.ne.s32.totalorder %s361, %s362
      %p374 = scmp.eq.s32.totalorder %s37, 1
      %p375 = por %p373, %p374
      %p377 = scmp.ne.s32.totalorder %s362, %s376
      %p378 = scmp.eq.s32.totalorder %s37, 0
      %p379 = por %p377, %p378
      %s381 = sadd.s32 %s380, 1
      %p384 = scmp.eq.s32.totalorder %s31, 1
      %p385 = scmp.ne.s32.totalorder %s380, %s382
      %p386 = scmp.eq.s32.totalorder %s31, 0
      %p387 = por %p385, %p386
      %p388 = scmp.ne.s32.totalorder %s380, %s382
      %p389 = scmp.eq.s32.totalorder %s36, 1
      %p390 = por %p388, %p389
      %p391 = scmp.ne.s32.totalorder %s382, %s383
      %p392 = scmp.eq.s32.totalorder %s36, 0
      %p393 = por %p391, %p392
      %p394 = scmp.ne.s32.totalorder %s382, %s383
      %p395 = scmp.eq.s32.totalorder %s37, 1
      %p396 = por %p394, %p395
      %p398 = scmp.ne.s32.totalorder %s383, %s397
      %p399 = scmp.eq.s32.totalorder %s37, 0
      %p400 = por %p398, %p399
      %s401 = ssub.s32 %s31, %s38
      %p402 = scmp.eq.s32.totalorder %s401, 0
      %s404 = sadd.s32 %s403, 1
      %s405 = scalar_select %p402, %s403, %s404
      %p408 = pneg %p402
      %p409 = scmp.eq.s32.totalorder %s31, 1
      %p410 = por %p408, %p409
      %p411 = scmp.ne.s32.totalorder %s403, %s406
      %p412 = scmp.eq.s32.totalorder %s31, 0
      %p413 = por %p411, %p412
      %p414 = scmp.ne.s32.totalorder %s403, %s406
      %p415 = scmp.eq.s32.totalorder %s36, 1
      %p416 = por %p414, %p415
      %p417 = scmp.ne.s32.totalorder %s406, %s407
      %p418 = scmp.eq.s32.totalorder %s36, 0
      %p419 = por %p417, %p418
      %p420 = scmp.ne.s32.totalorder %s406, %s407
      %p421 = scmp.eq.s32.totalorder %s37, 1
      %p422 = por %p420, %p421
      %p424 = scmp.ne.s32.totalorder %s407, %s423
      %p425 = scmp.eq.s32.totalorder %s37, 0
      %p426 = por %p424, %p425
      %s427 = ssub.s32 %s31, %s38
      %p428 = scmp.eq.s32.totalorder %s427, 0
      %s430 = sadd.s32 %s429, 1
      %s431 = scalar_select %p428, %s429, %s430
      %p434 = pneg %p428
      %p435 = scmp.eq.s32.totalorder %s31, 1
      %p436 = por %p434, %p435
      %p437 = scmp.ne.s32.totalorder %s429, %s432
      %p438 = scmp.eq.s32.totalorder %s31, 0
      %p439 = por %p437, %p438
      %p440 = scmp.ne.s32.totalorder %s429, %s432
      %p441 = scmp.eq.s32.totalorder %s36, 1
      %p442 = por %p440, %p441
      %p443 = scmp.ne.s32.totalorder %s432, %s433
      %p444 = scmp.eq.s32.totalorder %s36, 0
      %p445 = por %p443, %p444
      %p446 = scmp.ne.s32.totalorder %s432, %s433
      %p447 = scmp.eq.s32.totalorder %s37, 1
      %p448 = por %p446, %p447
      %p450 = scmp.ne.s32.totalorder %s433, %s449
      %p451 = scmp.eq.s32.totalorder %s37, 0
      %p452 = por %p450, %p451
      %p453 = scmp.le.s32.totalorder 1, %s31
      %p454 = scmp.lt.s32.totalorder %s31, 3
      %p455 = pnand %p453, %p454
      %p456 = pneg %p455
      // Predicated region
      $region9: #{_lambda_.1} parent=5 // pred_check
        _
      $region10: #{_lambda_.1} parent=5 // pred_check_branch
        %458 = sbr.rel (%p455) target = $region12
      $region11: #{_lambda_.1} parent=5 // pred_region
        %s459 = ssub.s32 %s31, 1
        // Predicated region
        $region13: #{_lambda_.1} parent=11 // pred_check
          %p460 = pneg %p78
        $region14: #{_lambda_.1} parent=11 // pred_check_branch
          %462 = sbr.rel (%p460) target = $region16
        $region15: #{_lambda_.1} parent=11 // pred_region
          _
        $region16: #{_lambda_.1} parent=11 // pred_fallthru
          _
        // Predicated region
        $region17: #{_lambda_.1} parent=11 // pred_check
          %p463 = pneg %p99
        $region18: #{_lambda_.1} parent=11 // pred_check_branch
          %465 = sbr.rel (%p463) target = $region20
        $region19: #{_lambda_.1} parent=11 // pred_region
          _
        $region20: #{_lambda_.1} parent=11 // pred_fallthru
          _
        // Predicated region
        $region21: #{_lambda_.1} parent=11 // pred_check
          %p466 = pneg %p120
        $region22: #{_lambda_.1} parent=11 // pred_check_branch
          %468 = sbr.rel (%p466) target = $region24
        $region23: #{_lambda_.1} parent=11 // pred_region
          _
        $region24: #{_lambda_.1} parent=11 // pred_fallthru
          _
        // Predicated region
        $region25: #{_lambda_.1} parent=11 // pred_check
          %p469 = pneg %p141
        $region26: #{_lambda_.1} parent=11 // pred_check_branch
          %471 = sbr.rel (%p469) target = $region28
        $region27: #{_lambda_.1} parent=11 // pred_region
          _
        $region28: #{_lambda_.1} parent=11 // pred_fallthru
          _
        // Predicated region
        $region29: #{_lambda_.1} parent=11 // pred_check
          %p472 = pneg %p162
        $region30: #{_lambda_.1} parent=11 // pred_check_branch
          %474 = sbr.rel (%p472) target = $region32
        $region31: #{_lambda_.1} parent=11 // pred_region
          _
        $region32: #{_lambda_.1} parent=11 // pred_fallthru
          _
        // Predicated region
        $region33: #{_lambda_.1} parent=11 // pred_check
          %p475 = pneg %p183
        $region34: #{_lambda_.1} parent=11 // pred_check_branch
          %477 = sbr.rel (%p475) target = $region36
        $region35: #{_lambda_.1} parent=11 // pred_region
          _
        $region36: #{_lambda_.1} parent=11 // pred_fallthru
          _
        // Predicated region
        $region37: #{_lambda_.1} parent=11 // pred_check
          %p478 = pneg %p204
        $region38: #{_lambda_.1} parent=11 // pred_check_branch
          %480 = sbr.rel (%p478) target = $region40
        $region39: #{_lambda_.1} parent=11 // pred_region
          _
        $region40: #{_lambda_.1} parent=11 // pred_fallthru
          _
        // Predicated region
        $region41: #{_lambda_.1} parent=11 // pred_check
          %p481 = pneg %p225
        $region42: #{_lambda_.1} parent=11 // pred_check_branch
          %483 = sbr.rel (%p481) target = $region44
        $region43: #{_lambda_.1} parent=11 // pred_region
          _
        $region44: #{_lambda_.1} parent=11 // pred_fallthru
          _
        // Predicated region
        $region45: #{_lambda_.1} parent=11 // pred_check
          %p484 = pneg %p246
        $region46: #{_lambda_.1} parent=11 // pred_check_branch
          %486 = sbr.rel (%p484) target = $region48
        $region47: #{_lambda_.1} parent=11 // pred_region
          _
        $region48: #{_lambda_.1} parent=11 // pred_fallthru
          _
        // Predicated region
        $region49: #{_lambda_.1} parent=11 // pred_check
          %p487 = pneg %p267
        $region50: #{_lambda_.1} parent=11 // pred_check_branch
          %489 = sbr.rel (%p487) target = $region52
        $region51: #{_lambda_.1} parent=11 // pred_region
          _
        $region52: #{_lambda_.1} parent=11 // pred_fallthru
          _
        // Predicated region
        $region53: #{_lambda_.1} parent=11 // pred_check
          %p490 = pneg %p288
        $region54: #{_lambda_.1} parent=11 // pred_check_branch
          %492 = sbr.rel (%p490) target = $region56
        $region55: #{_lambda_.1} parent=11 // pred_region
          _
        $region56: #{_lambda_.1} parent=11 // pred_fallthru
          _
        // Predicated region
        $region57: #{_lambda_.1} parent=11 // pred_check
          %p493 = pneg %p309
        $region58: #{_lambda_.1} parent=11 // pred_check_branch
          %495 = sbr.rel (%p493) target = $region60
        $region59: #{_lambda_.1} parent=11 // pred_region
          _
        $region60: #{_lambda_.1} parent=11 // pred_fallthru
          _
        // Predicated region
        $region61: #{_lambda_.1} parent=11 // pred_check
          %p496 = pneg %p330
        $region62: #{_lambda_.1} parent=11 // pred_check_branch
          %498 = sbr.rel (%p496) target = $region64
        $region63: #{_lambda_.1} parent=11 // pred_region
          _
        $region64: #{_lambda_.1} parent=11 // pred_fallthru
          _
        // Predicated region
        $region65: #{_lambda_.1} parent=11 // pred_check
          %p499 = pneg %p351
        $region66: #{_lambda_.1} parent=11 // pred_check_branch
          %501 = sbr.rel (%p499) target = $region68
        $region67: #{_lambda_.1} parent=11 // pred_region
          _
        $region68: #{_lambda_.1} parent=11 // pred_fallthru
          _
        // Predicated region
        $region69: #{_lambda_.1} parent=11 // pred_check
          %p502 = pneg %p372
        $region70: #{_lambda_.1} parent=11 // pred_check_branch
          %504 = sbr.rel (%p502) target = $region72
        $region71: #{_lambda_.1} parent=11 // pred_region
          _
        $region72: #{_lambda_.1} parent=11 // pred_fallthru
          _
        // Predicated region
        $region73: #{_lambda_.1} parent=11 // pred_check
          %p505 = pneg %p393
        $region74: #{_lambda_.1} parent=11 // pred_check_branch
          %507 = sbr.rel (%p505) target = $region76
        $region75: #{_lambda_.1} parent=11 // pred_region
          _
        $region76: #{_lambda_.1} parent=11 // pred_fallthru
          _
      $region12: #{_lambda_.1} parent=5 // pred_fallthru
        _
      %p508 = scmp.lt.s32.totalorder %s31, 2
      // Predicated region
      $region77: #{_lambda_.1} parent=5 // pred_check
        %p509 = pneg %p508
      $region78: #{_lambda_.1} parent=5 // pred_check_branch
        %511 = sbr.rel (%p509) target = $region80
      $region79: #{_lambda_.1} parent=5 // pred_region
        // Predicated region
        $region81: #{_lambda_.1} parent=79 // pred_check
          %p512 = pneg %p51
        $region82: #{_lambda_.1} parent=79 // pred_check_branch
          %514 = sbr.rel (%p512) target = $region84
        $region83: #{_lambda_.1} parent=79 // pred_region
          %p515 = scmp.lt.s32.totalorder %s31, 1
          %s516 = scalar_select %p515, %s31, 1
          %s517 = smul.addr %s516, 8
          %s518 = scalar_lea.vmem %s0, %s517
        $region84: #{_lambda_.1} parent=79 // pred_fallthru
          _
      $region80: #{_lambda_.1} parent=5 // pred_fallthru
        _
      %p519 = scmp.le.s32.totalorder 1, %s31
      %p520 = scmp.lt.s32.totalorder %s31, 3
      %p521 = pnand %p519, %p520
      %p522 = pneg %p521
      // Predicated region
      $region85: #{_lambda_.1} parent=5 // pred_check
        _
      $region86: #{_lambda_.1} parent=5 // pred_check_branch
        %524 = sbr.rel (%p521) target = $region88
      $region87: #{_lambda_.1} parent=5 // pred_region
        %s525 = ssub.s32 %s31, 1
        %p526 = scmp.lt.s32.totalorder %s36, 1
        %s527 = scalar_select %p526, %s36, 1
        %s528 = smul.addr %s527, 8
        %s529 = scalar_lea.vmem %s0, %s528
        %p530 = pneg %p57
        %p531 = pneg %p54
        %p532 = pneg %p78
        %p533 = pneg %p75
        %p534 = pneg %p99
        %p535 = pneg %p96
        %p536 = pneg %p120
        %p537 = pneg %p117
        %p538 = pneg %p141
        %p539 = pneg %p138
        %p540 = pneg %p162
        %p541 = pneg %p159
        %p542 = pneg %p183
        %p543 = pneg %p180
        %p544 = pneg %p204
        %p545 = pneg %p201
        %p546 = pneg %p225
        %p547 = pneg %p222
        %p548 = pneg %p246
        %p549 = pneg %p243
        %p550 = pneg %p267
        %p551 = pneg %p264
        %p552 = pneg %p288
        %p553 = pneg %p285
        %p554 = pneg %p309
        %p555 = pneg %p306
        %p556 = pneg %p330
        %p557 = pneg %p327
        %p558 = pneg %p351
        %p559 = pneg %p348
        %p560 = pneg %p372
        %p561 = pneg %p369
        %p562 = pneg %p393
        %p563 = pneg %p390
        %p564 = pneg %p419
        %p565 = pneg %p416
        %s566 = sand.u32 %s406, 1
        %s567 = scalar_lea.sflag [#allocation3], %s566
        %s568 = sand.u32 %s406, 1
        %s569 = smul.addr %s568, 8
        %s570 = scalar_lea.vmem [#allocation2], %s569
        %p571 = pneg %p445
        %p572 = pneg %p442
        %s573 = sand.u32 %s432, 1
        %s574 = scalar_lea.sflag [#allocation5], %s573
        %s575 = sand.u32 %s432, 1
        %s576 = smul.addr %s575, 32
        %s577 = scalar_lea.vmem [#allocation4], %s576
        %p578 = scmp.lt.s32.totalorder %s36, 1
        %s579 = scalar_select %p578, %s36, 1
        %s580 = smul.addr %s579, 8
        %s581 = scalar_lea.vmem %s0, %s580
        %v582 = vld [vmem:[%s581] sm:$0xff]
        %v583 = vld [vmem:[%s1] sm:$0xff]
        %v584 = vld [vmem:[%s1 + $0x8] sm:$0xff]
        %v585 = vld [vmem:[%s1 + $0x10] sm:$0xff]
        %v586 = vld [vmem:[%s1 + $0x18] sm:$0xff]
        %v587 = vld [vmem:[%s2] sm:$0x1]
        %v589 = vlaneseq
        %v590 = vshrl.u32 %v589, 7
        %v591 = vsub.s32 0, %v590
        %v592 = vrot.slane %v587, %v591
        %vm594 = vcmask 261120
        %v596 = vsel %vm594, %v582, 0
        %598 = vmatprep.subr.mxu0 0.0
        %599 = vmatpush1.msra.mxu0 0.0
        %600 = vmatprep.subr.mxu0 0.0
        %601 = vmatpush1.msra.mxu0 0.0
        %602 = vmatprep.subr.mxu0 0.0
        %603 = vmatpush1.msra.mxu0 0.0
        %604 = vmatprep.subr.mxu0 0.0
        %605 = vmatpush1.msra.mxu0 0.0
        %606 = vmatprep.subr.mxu0 0.0
        %607 = vmatpush1.msra.mxu0 0.0
        %608 = vmatprep.subr.mxu0 0.0
        %609 = vmatpush1.msra.mxu0 0.0
        %610 = vmatprep.subr.mxu0 0.0
        %611 = vmatpush1.msra.mxu0 0.0
        %612 = vmatprep.subr.mxu0 0.0
        %613 = vmatpush1.msra.mxu0 0.0
        %614 = vmatprep.subr.mxu0 0.0
        %615 = vmatpush1.msra.mxu0 0.0
        %616 = vmatprep.subr.mxu0 0.0
        %617 = vmatpush1.msra.mxu0 0.0
        %618 = vmatprep.subr.mxu0 0.0
        %619 = vmatpush1.msra.mxu0 0.0
        %620 = vmatprep.subr.mxu0 0.0
        %621 = vmatpush1.msra.mxu0 0.0
        %622 = vmatprep.subr.mxu0 0.0
        %623 = vmatpush1.msra.mxu0 %v586
        %624 = vmatprep.subr.mxu0 0.0
        %625 = vmatpush1.msra.mxu0 %v585
        %626 = vmatprep.subr.mxu0 0.0
        %627 = vmatpush1.msra.mxu0 %v584
        %628 = vmatprep.subr.mxu0 0.0
        %629 = vmatpush1.msra.mxu0 %v583
        %630 = vmatprep.subr.mxu0 0.0
        %631 = vmatpush2.msra.mxu0 0.0
        %632 = vmatprep.subr.mxu0 0.0
        %633 = vmatpush2.msra.mxu0 0.0
        %634 = vmatprep.subr.mxu0 0.0
        %635 = vmatpush2.msra.mxu0 0.0
        %636 = vmatprep.subr.mxu0 0.0
        %637 = vmatpush2.msra.mxu0 0.0
        %638 = vmatprep.subr.mxu0 0.0
        %639 = vmatpush2.msra.mxu0 0.0
        %640 = vmatprep.subr.mxu0 0.0
        %641 = vmatpush2.msra.mxu0 0.0
        %642 = vmatprep.subr.mxu0 0.0
        %643 = vmatpush2.msra.mxu0 0.0
        %644 = vmatprep.subr.mxu0 0.0
        %645 = vmatpush2.msra.mxu0 0.0
        %646 = vmatprep.subr.mxu0 0.0
        %647 = vmatpush2.msra.mxu0 0.0
        %648 = vmatprep.subr.mxu0 0.0
        %649 = vmatpush2.msra.mxu0 0.0
        %650 = vmatprep.subr.mxu0 0.0
        %651 = vmatpush2.msra.mxu0 0.0
        %652 = vmatprep.subr.mxu0 0.0
        %653 = vmatpush2.msra.mxu0 0.0
        %654 = vmatprep.subr.mxu0 0.0
        %655 = vmatpush2.msra.mxu0 0.0
        %656 = vmatprep.subr.mxu0 0.0
        %657 = vmatpush2.msra.mxu0 0.0
        %658 = vmatprep.subr.mxu0 0.0
        %659 = vmatpush2.msra.mxu0 0.0
        %660 = vmatprep.subr.mxu0 0.0
        %661 = vmatpush2.msra.mxu0 0.0
        %662 = vmatprep.mubr.f32.mxu0 0.0
        %663 = vmatmul.mubr.f32.gmra.mxu0 %v596
        %v664 = vpop.f32.mrf.mxu0
        %v665 = vadd.f32 %v592, %v664
        %v666 = vpop.f32.mrf.mxu0
        %667 = vdwg.mxu0
        %v668 = vld [vmem:[%s3] sm:$0xff]
        %v669 = vld [vmem:[%s3 + $0x8] sm:$0xff]
        %v670 = vld [vmem:[%s3 + $0x10] sm:$0xff]
        %v671 = vld [vmem:[%s3 + $0x18] sm:$0xff]
        %v672 = vld [vmem:[%s4] sm:$0x1]
        %v674 = vlaneseq
        %v675 = vshrl.u32 %v674, 7
        %v676 = vsub.s32 0, %v675
        %v677 = vrot.slane %v672, %v676
        %679 = vmatprep.subr.mxu0 0.0
        %680 = vmatpush1.msra.mxu0 0.0
        %681 = vmatprep.subr.mxu0 0.0
        %682 = vmatpush1.msra.mxu0 0.0
        %683 = vmatprep.subr.mxu0 0.0
        %684 = vmatpush1.msra.mxu0 0.0
        %685 = vmatprep.subr.mxu0 0.0
        %686 = vmatpush1.msra.mxu0 0.0
        %687 = vmatprep.subr.mxu0 0.0
        %688 = vmatpush1.msra.mxu0 0.0
        %689 = vmatprep.subr.mxu0 0.0
        %690 = vmatpush1.msra.mxu0 0.0
        %691 = vmatprep.subr.mxu0 0.0
        %692 = vmatpush1.msra.mxu0 0.0
        %693 = vmatprep.subr.mxu0 0.0
        %694 = vmatpush1.msra.mxu0 0.0
        %695 = vmatprep.subr.mxu0 0.0
        %696 = vmatpush1.msra.mxu0 0.0
        %697 = vmatprep.subr.mxu0 0.0
        %698 = vmatpush1.msra.mxu0 0.0
        %699 = vmatprep.subr.mxu0 0.0
        %700 = vmatpush1.msra.mxu0 0.0
        %701 = vmatprep.subr.mxu0 0.0
        %702 = vmatpush1.msra.mxu0 0.0
        %703 = vmatprep.subr.mxu0 0.0
        %704 = vmatpush1.msra.mxu0 %v671
        %705 = vmatprep.subr.mxu0 0.0
        %706 = vmatpush1.msra.mxu0 %v670
        %707 = vmatprep.subr.mxu0 0.0
        %708 = vmatpush1.msra.mxu0 %v669
        %709 = vmatprep.subr.mxu0 0.0
        %710 = vmatpush1.msra.mxu0 %v668
        %711 = vmatprep.subr.mxu0 0.0
        %712 = vmatpush2.msra.mxu0 0.0
        %713 = vmatprep.subr.mxu0 0.0
        %714 = vmatpush2.msra.mxu0 0.0
        %715 = vmatprep.subr.mxu0 0.0
        %716 = vmatpush2.msra.mxu0 0.0
        %717 = vmatprep.subr.mxu0 0.0
        %718 = vmatpush2.msra.mxu0 0.0
        %719 = vmatprep.subr.mxu0 0.0
        %720 = vmatpush2.msra.mxu0 0.0
        %721 = vmatprep.subr.mxu0 0.0
        %722 = vmatpush2.msra.mxu0 0.0
        %723 = vmatprep.subr.mxu0 0.0
        %724 = vmatpush2.msra.mxu0 0.0
        %725 = vmatprep.subr.mxu0 0.0
        %726 = vmatpush2.msra.mxu0 0.0
        %727 = vmatprep.subr.mxu0 0.0
        %728 = vmatpush2.msra.mxu0 0.0
        %729 = vmatprep.subr.mxu0 0.0
        %730 = vmatpush2.msra.mxu0 0.0
        %731 = vmatprep.subr.mxu0 0.0
        %732 = vmatpush2.msra.mxu0 0.0
        %733 = vmatprep.subr.mxu0 0.0
        %734 = vmatpush2.msra.mxu0 0.0
        %735 = vmatprep.subr.mxu0 0.0
        %736 = vmatpush2.msra.mxu0 0.0
        %737 = vmatprep.subr.mxu0 0.0
        %738 = vmatpush2.msra.mxu0 0.0
        %739 = vmatprep.subr.mxu0 0.0
        %740 = vmatpush2.msra.mxu0 0.0
        %741 = vmatprep.subr.mxu0 0.0
        %742 = vmatpush2.msra.mxu0 0.0
        %743 = vmatprep.mubr.f32.mxu0 0.0
        %744 = vmatmul.mubr.f32.gmra.mxu0 %v596
        %v745 = vpop.f32.mrf.mxu0
        %v746 = vadd.f32 %v677, %v745
        %v747 = vpop.f32.mrf.mxu0
        %748 = vdwg.mxu0
        %v749 = vld [vmem:[%s5] sm:$0xff]
        %v750 = vld [vmem:[%s5 + $0x8] sm:$0xff]
        %v751 = vld [vmem:[%s5 + $0x10] sm:$0xff]
        %v752 = vld [vmem:[%s5 + $0x18] sm:$0xff]
        %v753 = vld [vmem:[%s6] sm:$0x1]
        %v755 = vlaneseq
        %v756 = vshrl.u32 %v755, 7
        %v757 = vsub.s32 0, %v756
        %v758 = vrot.slane %v753, %v757
        %760 = vmatprep.subr.mxu0 0.0
        %761 = vmatpush1.msra.mxu0 0.0
        %762 = vmatprep.subr.mxu0 0.0
        %763 = vmatpush1.msra.mxu0 0.0
        %764 = vmatprep.subr.mxu0 0.0
        %765 = vmatpush1.msra.mxu0 0.0
        %766 = vmatprep.subr.mxu0 0.0
        %767 = vmatpush1.msra.mxu0 0.0
        %768 = vmatprep.subr.mxu0 0.0
        %769 = vmatpush1.msra.mxu0 0.0
        %770 = vmatprep.subr.mxu0 0.0
        %771 = vmatpush1.msra.mxu0 0.0
        %772 = vmatprep.subr.mxu0 0.0
        %773 = vmatpush1.msra.mxu0 0.0
        %774 = vmatprep.subr.mxu0 0.0
        %775 = vmatpush1.msra.mxu0 0.0
        %776 = vmatprep.subr.mxu0 0.0
        %777 = vmatpush1.msra.mxu0 0.0
        %778 = vmatprep.subr.mxu0 0.0
        %779 = vmatpush1.msra.mxu0 0.0
        %780 = vmatprep.subr.mxu0 0.0
        %781 = vmatpush1.msra.mxu0 0.0
        %782 = vmatprep.subr.mxu0 0.0
        %783 = vmatpush1.msra.mxu0 0.0
        %784 = vmatprep.subr.mxu0 0.0
        %785 = vmatpush1.msra.mxu0 %v752
        %786 = vmatprep.subr.mxu0 0.0
        %787 = vmatpush1.msra.mxu0 %v751
        %788 = vmatprep.subr.mxu0 0.0
        %789 = vmatpush1.msra.mxu0 %v750
        %790 = vmatprep.subr.mxu0 0.0
        %791 = vmatpush1.msra.mxu0 %v749
        %792 = vmatprep.subr.mxu0 0.0
        %793 = vmatpush2.msra.mxu0 0.0
        %794 = vmatprep.subr.mxu0 0.0
        %795 = vmatpush2.msra.mxu0 0.0
        %796 = vmatprep.subr.mxu0 0.0
        %797 = vmatpush2.msra.mxu0 0.0
        %798 = vmatprep.subr.mxu0 0.0
        %799 = vmatpush2.msra.mxu0 0.0
        %800 = vmatprep.subr.mxu0 0.0
        %801 = vmatpush2.msra.mxu0 0.0
        %802 = vmatprep.subr.mxu0 0.0
        %803 = vmatpush2.msra.mxu0 0.0
        %804 = vmatprep.subr.mxu0 0.0
        %805 = vmatpush2.msra.mxu0 0.0
        %806 = vmatprep.subr.mxu0 0.0
        %807 = vmatpush2.msra.mxu0 0.0
        %808 = vmatprep.subr.mxu0 0.0
        %809 = vmatpush2.msra.mxu0 0.0
        %810 = vmatprep.subr.mxu0 0.0
        %811 = vmatpush2.msra.mxu0 0.0
        %812 = vmatprep.subr.mxu0 0.0
        %813 = vmatpush2.msra.mxu0 0.0
        %814 = vmatprep.subr.mxu0 0.0
        %815 = vmatpush2.msra.mxu0 0.0
        %816 = vmatprep.subr.mxu0 0.0
        %817 = vmatpush2.msra.mxu0 0.0
        %818 = vmatprep.subr.mxu0 0.0
        %819 = vmatpush2.msra.mxu0 0.0
        %820 = vmatprep.subr.mxu0 0.0
        %821 = vmatpush2.msra.mxu0 0.0
        %822 = vmatprep.subr.mxu0 0.0
        %823 = vmatpush2.msra.mxu0 0.0
        %824 = vmatprep.mubr.f32.mxu0 0.0
        %825 = vmatmul.mubr.f32.gmra.mxu0 %v596
        %v826 = vpop.f32.mrf.mxu0
        %v827 = vadd.f32 %v758, %v826
        %v828 = vpop.f32.mrf.mxu0
        %829 = vdwg.mxu0
        %v830 = vld [vmem:[%s7] sm:$0xff]
        %v831 = vld [vmem:[%s7 + $0x8] sm:$0xff]
        %v832 = vld [vmem:[%s7 + $0x10] sm:$0xff]
        %v833 = vld [vmem:[%s7 + $0x18] sm:$0xff]
        %v834 = vld [vmem:[%s7 + $0x20] sm:$0xff]
        %v835 = vld [vmem:[%s7 + $0x28] sm:$0xff]
        %v836 = vld [vmem:[%s7 + $0x30] sm:$0xff]
        %v837 = vld [vmem:[%s7 + $0x38] sm:$0xff]
        %v838 = vmul.f32 %v665, 0.25
        %vm839 = vcmask 130048
        %v841 = vsel %vm839, %v838, 0
        %v844 = vsel %vm839, %v746, 0
        %846 = vmatprep.subr.mxu0 0.0
        %847 = vmatpush1.xpose.msra.mxu0 0.0
        %848 = vmatprep.subr.mxu0 0.0
        %849 = vmatpush1.xpose.msra.mxu0 0.0
        %850 = vmatprep.subr.mxu0 0.0
        %851 = vmatpush1.xpose.msra.mxu0 0.0
        %852 = vmatprep.subr.mxu0 0.0
        %853 = vmatpush1.xpose.msra.mxu0 0.0
        %854 = vmatprep.subr.mxu0 0.0
        %855 = vmatpush1.xpose.msra.mxu0 0.0
        %856 = vmatprep.subr.mxu0 0.0
        %857 = vmatpush1.xpose.msra.mxu0 0.0
        %858 = vmatprep.subr.mxu0 0.0
        %859 = vmatpush1.xpose.msra.mxu0 0.0
        %860 = vmatprep.subr.mxu0 0.0
        %861 = vmatpush1.xpose.msra.mxu0 0.0
        %862 = vmatprep.subr.mxu0 0.0
        %863 = vmatpush1.xpose.msra.mxu0 0.0
        %864 = vmatprep.subr.mxu0 0.0
        %865 = vmatpush1.xpose.msra.mxu0 0.0
        %866 = vmatprep.subr.mxu0 0.0
        %867 = vmatpush1.xpose.msra.mxu0 0.0
        %868 = vmatprep.subr.mxu0 0.0
        %869 = vmatpush1.xpose.msra.mxu0 0.0
        %870 = vmatprep.subr.mxu0 0.0
        %871 = vmatpush1.xpose.msra.mxu0 0.0
        %872 = vmatprep.subr.mxu0 0.0
        %873 = vmatpush1.xpose.msra.mxu0 0.0
        %874 = vmatprep.subr.mxu0 0.0
        %875 = vmatpush1.xpose.msra.mxu0 0.0
        %876 = vmatprep.subr.mxu0 0.0
        %877 = vmatpush1.xpose.msra.mxu0 %v844
        %878 = vmatprep.subr.mxu0 0.0
        %879 = vmatpush2.xpose.msra.mxu0 0.0
        %880 = vmatprep.subr.mxu0 0.0
        %881 = vmatpush2.xpose.msra.mxu0 0.0
        %882 = vmatprep.subr.mxu0 0.0
        %883 = vmatpush2.xpose.msra.mxu0 0.0
        %884 = vmatprep.subr.mxu0 0.0
        %885 = vmatpush2.xpose.msra.mxu0 0.0
        %886 = vmatprep.subr.mxu0 0.0
        %887 = vmatpush2.xpose.msra.mxu0 0.0
        %888 = vmatprep.subr.mxu0 0.0
        %889 = vmatpush2.xpose.msra.mxu0 0.0
        %890 = vmatprep.subr.mxu0 0.0
        %891 = vmatpush2.xpose.msra.mxu0 0.0
        %892 = vmatprep.subr.mxu0 0.0
        %893 = vmatpush2.xpose.msra.mxu0 0.0
        %894 = vmatprep.subr.mxu0 0.0
        %895 = vmatpush2.xpose.msra.mxu0 0.0
        %896 = vmatprep.subr.mxu0 0.0
        %897 = vmatpush2.xpose.msra.mxu0 0.0
        %898 = vmatprep.subr.mxu0 0.0
        %899 = vmatpush2.xpose.msra.mxu0 0.0
        %900 = vmatprep.subr.mxu0 0.0
        %901 = vmatpush2.xpose.msra.mxu0 0.0
        %902 = vmatprep.subr.mxu0 0.0
        %903 = vmatpush2.xpose.msra.mxu0 0.0
        %904 = vmatprep.subr.mxu0 0.0
        %905 = vmatpush2.xpose.msra.mxu0 0.0
        %906 = vmatprep.subr.mxu0 0.0
        %907 = vmatpush2.xpose.msra.mxu0 0.0
        %908 = vmatprep.subr.mxu0 0.0
        %909 = vmatpush2.xpose.msra.mxu0 0.0
        %910 = vmatprep.mubr.f32.mxu0 0.0
        %911 = vmatmul.mubr.f32.gmra.mxu0 %v841
        %v912 = vpop.f32.mrf.mxu0
        %v913 = vadd.f32 0.0, %v912
        %v914 = vpop.f32.mrf.mxu0
        %915 = vdwg.mxu0
        %vm916 = vcmask 64512
        %v917 = vsel %vm916, %v913, -inf
        %918 = vmax.xlane.f32.xlu0 %v917
        %v919 = vpop.xlane.xlu0 %918
        %v920 = vsub.f32 %v913, %v919
        %v921 = vmul.f32 %v920, 1.442695
        %v922 = vpow.pop %v921
        %v923 = vsel %vm916, %v922, 0.0
        %924 = vadd.xlane.f32.xlu0 %v923
        %v925 = vpop.xlane.xlu0 %924
        %v926 = vrcp.pop %v925
        %v927 = vmul.f32 %v922, %v926
        %928 = vst.msk [vmem:[%s577] sm:$0xff] %vm916, %v927
        %v930 = vsel %vm916, %v927, 0
        %932 = vmatprep.subr.mxu0 0.0
        %933 = vmatpush1.msra.mxu0 0.0
        %934 = vmatprep.subr.mxu0 0.0
        %935 = vmatpush1.msra.mxu0 0.0
        %936 = vmatprep.subr.mxu0 0.0
        %937 = vmatpush1.msra.mxu0 0.0
        %938 = vmatprep.subr.mxu0 0.0
        %939 = vmatpush1.msra.mxu0 0.0
        %940 = vmatprep.subr.mxu0 0.0
        %941 = vmatpush1.msra.mxu0 0.0
        %942 = vmatprep.subr.mxu0 0.0
        %943 = vmatpush1.msra.mxu0 0.0
        %944 = vmatprep.subr.mxu0 0.0
        %945 = vmatpush1.msra.mxu0 0.0
        %946 = vmatprep.subr.mxu0 0.0
        %947 = vmatpush1.msra.mxu0 0.0
        %948 = vmatprep.subr.mxu0 0.0
        %949 = vmatpush1.msra.mxu0 0.0
        %950 = vmatprep.subr.mxu0 0.0
        %951 = vmatpush1.msra.mxu0 0.0
        %952 = vmatprep.subr.mxu0 0.0
        %953 = vmatpush1.msra.mxu0 0.0
        %954 = vmatprep.subr.mxu0 0.0
        %955 = vmatpush1.msra.mxu0 0.0
        %956 = vmatprep.subr.mxu0 0.0
        %957 = vmatpush1.msra.mxu0 0.0
        %958 = vmatprep.subr.mxu0 0.0
        %959 = vmatpush1.msra.mxu0 0.0
        %960 = vmatprep.subr.mxu0 0.0
        %961 = vmatpush1.msra.mxu0 0.0
        %962 = vmatprep.subr.mxu0 0.0
        %963 = vmatpush1.msra.mxu0 %v827
        %964 = vmatprep.subr.mxu0 0.0
        %965 = vmatpush2.msra.mxu0 0.0
        %966 = vmatprep.subr.mxu0 0.0
        %967 = vmatpush2.msra.mxu0 0.0
        %968 = vmatprep.subr.mxu0 0.0
        %969 = vmatpush2.msra.mxu0 0.0
        %970 = vmatprep.subr.mxu0 0.0
        %971 = vmatpush2.msra.mxu0 0.0
        %972 = vmatprep.subr.mxu0 0.0
        %973 = vmatpush2.msra.mxu0 0.0
        %974 = vmatprep.subr.mxu0 0.0
        %975 = vmatpush2.msra.mxu0 0.0
        %976 = vmatprep.subr.mxu0 0.0
        %977 = vmatpush2.msra.mxu0 0.0
        %978 = vmatprep.subr.mxu0 0.0
        %979 = vmatpush2.msra.mxu0 0.0
        %980 = vmatprep.subr.mxu0 0.0
        %981 = vmatpush2.msra.mxu0 0.0
        %982 = vmatprep.subr.mxu0 0.0
        %983 = vmatpush2.msra.mxu0 0.0
        %984 = vmatprep.subr.mxu0 0.0
        %985 = vmatpush2.msra.mxu0 0.0
        %986 = vmatprep.subr.mxu0 0.0
        %987 = vmatpush2.msra.mxu0 0.0
        %988 = vmatprep.subr.mxu0 0.0
        %989 = vmatpush2.msra.mxu0 0.0
        %990 = vmatprep.subr.mxu0 0.0
        %991 = vmatpush2.msra.mxu0 0.0
        %992 = vmatprep.subr.mxu0 0.0
        %993 = vmatpush2.msra.mxu0 0.0
        %994 = vmatprep.subr.mxu0 0.0
        %995 = vmatpush2.msra.mxu0 0.0
        %996 = vmatprep.mubr.f32.mxu0 0.0
        %997 = vmatmul.mubr.f32.gmra.mxu0 %v930
        %v998 = vpop.f32.mrf.mxu0
        %v999 = vadd.f32 0.0, %v998
        %v1000 = vpop.f32.mrf.mxu0
        %1001 = vdwg.mxu0
        %1002 = vrot.lane.b32.xlu0 %v838, 112
        %v1003 = vpop.permute.xlu0 %1002
        %1004 = vrot.lane.b32.xlu0 %v746, 112
        %v1005 = vpop.permute.xlu0 %1004
        %v1006 = vsel %vm839, %v1003, 0
        %v1008 = vsel %vm839, %v1005, 0
        %1010 = vmatprep.subr.mxu0 0.0
        %1011 = vmatpush1.xpose.msra.mxu0 0.0
        %1012 = vmatprep.subr.mxu0 0.0
        %1013 = vmatpush1.xpose.msra.mxu0 0.0
        %1014 = vmatprep.subr.mxu0 0.0
        %1015 = vmatpush1.xpose.msra.mxu0 0.0
        %1016 = vmatprep.subr.mxu0 0.0
        %1017 = vmatpush1.xpose.msra.mxu0 0.0
        %1018 = vmatprep.subr.mxu0 0.0
        %1019 = vmatpush1.xpose.msra.mxu0 0.0
        %1020 = vmatprep.subr.mxu0 0.0
        %1021 = vmatpush1.xpose.msra.mxu0 0.0
        %1022 = vmatprep.subr.mxu0 0.0
        %1023 = vmatpush1.xpose.msra.mxu0 0.0
        %1024 = vmatprep.subr.mxu0 0.0
        %1025 = vmatpush1.xpose.msra.mxu0 0.0
        %1026 = vmatprep.subr.mxu0 0.0
        %1027 = vmatpush1.xpose.msra.mxu0 0.0
        %1028 = vmatprep.subr.mxu0 0.0
        %1029 = vmatpush1.xpose.msra.mxu0 0.0
        %1030 = vmatprep.subr.mxu0 0.0
        %1031 = vmatpush1.xpose.msra.mxu0 0.0
        %1032 = vmatprep.subr.mxu0 0.0
        %1033 = vmatpush1.xpose.msra.mxu0 0.0
        %1034 = vmatprep.subr.mxu0 0.0
        %1035 = vmatpush1.xpose.msra.mxu0 0.0
        %1036 = vmatprep.subr.mxu0 0.0
        %1037 = vmatpush1.xpose.msra.mxu0 0.0
        %1038 = vmatprep.subr.mxu0 0.0
        %1039 = vmatpush1.xpose.msra.mxu0 0.0
        %1040 = vmatprep.subr.mxu0 0.0
        %1041 = vmatpush1.xpose.msra.mxu0 %v1008
        %1042 = vmatprep.subr.mxu0 0.0
        %1043 = vmatpush2.xpose.msra.mxu0 0.0
        %1044 = vmatprep.subr.mxu0 0.0
        %1045 = vmatpush2.xpose.msra.mxu0 0.0
        %1046 = vmatprep.subr.mxu0 0.0
        %1047 = vmatpush2.xpose.msra.mxu0 0.0
        %1048 = vmatprep.subr.mxu0 0.0
        %1049 = vmatpush2.xpose.msra.mxu0 0.0
        %1050 = vmatprep.subr.mxu0 0.0
        %1051 = vmatpush2.xpose.msra.mxu0 0.0
        %1052 = vmatprep.subr.mxu0 0.0
        %1053 = vmatpush2.xpose.msra.mxu0 0.0
        %1054 = vmatprep.subr.mxu0 0.0
        %1055 = vmatpush2.xpose.msra.mxu0 0.0
        %1056 = vmatprep.subr.mxu0 0.0
        %1057 = vmatpush2.xpose.msra.mxu0 0.0
        %1058 = vmatprep.subr.mxu0 0.0
        %1059 = vmatpush2.xpose.msra.mxu0 0.0
        %1060 = vmatprep.subr.mxu0 0.0
        %1061 = vmatpush2.xpose.msra.mxu0 0.0
        %1062 = vmatprep.subr.mxu0 0.0
        %1063 = vmatpush2.xpose.msra.mxu0 0.0
        %1064 = vmatprep.subr.mxu0 0.0
        %1065 = vmatpush2.xpose.msra.mxu0 0.0
        %1066 = vmatprep.subr.mxu0 0.0
        %1067 = vmatpush2.xpose.msra.mxu0 0.0
        %1068 = vmatprep.subr.mxu0 0.0
        %1069 = vmatpush2.xpose.msra.mxu0 0.0
        %1070 = vmatprep.subr.mxu0 0.0
        %1071 = vmatpush2.xpose.msra.mxu0 0.0
        %1072 = vmatprep.subr.mxu0 0.0
        %1073 = vmatpush2.xpose.msra.mxu0 0.0
        %1074 = vmatprep.mubr.f32.mxu0 0.0
        %1075 = vmatmul.mubr.f32.gmra.mxu0 %v1006
        %v1076 = vpop.f32.mrf.mxu0
        %v1077 = vadd.f32 0.0, %v1076
        %v1078 = vpop.f32.mrf.mxu0
        %1079 = vdwg.mxu0
        %v1080 = vsel %vm916, %v1077, -inf
        %1081 = vmax.xlane.f32.xlu0 %v1080
        %v1082 = vpop.xlane.xlu0 %1081
        %v1083 = vsub.f32 %v1077, %v1082
        %v1084 = vmul.f32 %v1083, 1.442695
        %v1085 = vpow.pop %v1084
        %v1086 = vsel %vm916, %v1085, 0.0
        %1087 = vadd.xlane.f32.xlu0 %v1086
        %v1088 = vpop.xlane.xlu0 %1087
        %v1089 = vrcp.pop %v1088
        %v1090 = vmul.f32 %v1085, %v1089
        %s1091 = scalar_lea.vmem %s577, 8 [#allocation4]
        %1092 = vst.msk [vmem:[%s1091] sm:$0xff] %vm916, %v1090
        %1094 = vrot.lane.b32.xlu0 %v827, 112
        %v1095 = vpop.permute.xlu0 %1094
        %v1098 = vsel %vm916, %v1090, 0
        %1100 = vmatprep.subr.mxu0 0.0
        %1101 = vmatpush1.msra.mxu0 0.0
        %1102 = vmatprep.subr.mxu0 0.0
        %1103 = vmatpush1.msra.mxu0 0.0
        %1104 = vmatprep.subr.mxu0 0.0
        %1105 = vmatpush1.msra.mxu0 0.0
        %1106 = vmatprep.subr.mxu0 0.0
        %1107 = vmatpush1.msra.mxu0 0.0
        %1108 = vmatprep.subr.mxu0 0.0
        %1109 = vmatpush1.msra.mxu0 0.0
        %1110 = vmatprep.subr.mxu0 0.0
        %1111 = vmatpush1.msra.mxu0 0.0
        %1112 = vmatprep.subr.mxu0 0.0
        %1113 = vmatpush1.msra.mxu0 0.0
        %1114 = vmatprep.subr.mxu0 0.0
        %1115 = vmatpush1.msra.mxu0 0.0
        %1116 = vmatprep.subr.mxu0 0.0
        %1117 = vmatpush1.msra.mxu0 0.0
        %1118 = vmatprep.subr.mxu0 0.0
        %1119 = vmatpush1.msra.mxu0 0.0
        %1120 = vmatprep.subr.mxu0 0.0
        %1121 = vmatpush1.msra.mxu0 0.0
        %1122 = vmatprep.subr.mxu0 0.0
        %1123 = vmatpush1.msra.mxu0 0.0
        %1124 = vmatprep.subr.mxu0 0.0
        %1125 = vmatpush1.msra.mxu0 0.0
        %1126 = vmatprep.subr.mxu0 0.0
        %1127 = vmatpush1.msra.mxu0 0.0
        %1128 = vmatprep.subr.mxu0 0.0
        %1129 = vmatpush1.msra.mxu0 0.0
        %1130 = vmatprep.subr.mxu0 0.0
        %1131 = vmatpush1.msra.mxu0 %v1095
        %1132 = vmatprep.subr.mxu0 0.0
        %1133 = vmatpush2.msra.mxu0 0.0
        %1134 = vmatprep.subr.mxu0 0.0
        %1135 = vmatpush2.msra.mxu0 0.0
        %1136 = vmatprep.subr.mxu0 0.0
        %1137 = vmatpush2.msra.mxu0 0.0
        %1138 = vmatprep.subr.mxu0 0.0
        %1139 = vmatpush2.msra.mxu0 0.0
        %1140 = vmatprep.subr.mxu0 0.0
        %1141 = vmatpush2.msra.mxu0 0.0
        %1142 = vmatprep.subr.mxu0 0.0
        %1143 = vmatpush2.msra.mxu0 0.0
        %1144 = vmatprep.subr.mxu0 0.0
        %1145 = vmatpush2.msra.mxu0 0.0
        %1146 = vmatprep.subr.mxu0 0.0
        %1147 = vmatpush2.msra.mxu0 0.0
        %1148 = vmatprep.subr.mxu0 0.0
        %1149 = vmatpush2.msra.mxu0 0.0
        %1150 = vmatprep.subr.mxu0 0.0
        %1151 = vmatpush2.msra.mxu0 0.0
        %1152 = vmatprep.subr.mxu0 0.0
        %1153 = vmatpush2.msra.mxu0 0.0
        %1154 = vmatprep.subr.mxu0 0.0
        %1155 = vmatpush2.msra.mxu0 0.0
        %1156 = vmatprep.subr.mxu0 0.0
        %1157 = vmatpush2.msra.mxu0 0.0
        %1158 = vmatprep.subr.mxu0 0.0
        %1159 = vmatpush2.msra.mxu0 0.0
        %1160 = vmatprep.subr.mxu0 0.0
        %1161 = vmatpush2.msra.mxu0 0.0
        %1162 = vmatprep.subr.mxu0 0.0
        %1163 = vmatpush2.msra.mxu0 0.0
        %1164 = vmatprep.mubr.f32.mxu0 0.0
        %1165 = vmatmul.mubr.f32.gmra.mxu0 %v1098
        %v1166 = vpop.f32.mrf.mxu0
        %v1167 = vadd.f32 0.0, %v1166
        %v1168 = vpop.f32.mrf.mxu0
        %1169 = vdwg.mxu0
        %v1171 = vsel %vm839, %v1167, 0
        %1173 = vmatprep.subr.mxu0 0.0
        %1174 = vmatpush1.msra.mxu0 0.0
        %1175 = vmatprep.subr.mxu0 0.0
        %1176 = vmatpush1.msra.mxu0 0.0
        %1177 = vmatprep.subr.mxu0 0.0
        %1178 = vmatpush1.msra.mxu0 0.0
        %1179 = vmatprep.subr.mxu0 0.0
        %1180 = vmatpush1.msra.mxu0 0.0
        %1181 = vmatprep.subr.mxu0 0.0
        %1182 = vmatpush1.msra.mxu0 0.0
        %1183 = vmatprep.subr.mxu0 0.0
        %1184 = vmatpush1.msra.mxu0 0.0
        %1185 = vmatprep.subr.mxu0 0.0
        %1186 = vmatpush1.msra.mxu0 0.0
        %1187 = vmatprep.subr.mxu0 0.0
        %1188 = vmatpush1.msra.mxu0 0.0
        %1189 = vmatprep.subr.mxu0 0.0
        %1190 = vmatpush1.msra.mxu0 0.0
        %1191 = vmatprep.subr.mxu0 0.0
        %1192 = vmatpush1.msra.mxu0 0.0
        %1193 = vmatprep.subr.mxu0 0.0
        %1194 = vmatpush1.msra.mxu0 0.0
        %1195 = vmatprep.subr.mxu0 0.0
        %1196 = vmatpush1.msra.mxu0 0.0
        %1197 = vmatprep.subr.mxu0 0.0
        %1198 = vmatpush1.msra.mxu0 0.0
        %1199 = vmatprep.subr.mxu0 0.0
        %1200 = vmatpush1.msra.mxu0 0.0
        %1201 = vmatprep.subr.mxu0 0.0
        %1202 = vmatpush1.msra.mxu0 %v833
        %1203 = vmatprep.subr.mxu0 0.0
        %1204 = vmatpush1.msra.mxu0 %v832
        %1205 = vmatprep.subr.mxu0 0.0
        %1206 = vmatpush2.msra.mxu0 0.0
        %1207 = vmatprep.subr.mxu0 0.0
        %1208 = vmatpush2.msra.mxu0 0.0
        %1209 = vmatprep.subr.mxu0 0.0
        %1210 = vmatpush2.msra.mxu0 0.0
        %1211 = vmatprep.subr.mxu0 0.0
        %1212 = vmatpush2.msra.mxu0 0.0
        %1213 = vmatprep.subr.mxu0 0.0
        %1214 = vmatpush2.msra.mxu0 0.0
        %1215 = vmatprep.subr.mxu0 0.0
        %1216 = vmatpush2.msra.mxu0 0.0
        %1217 = vmatprep.subr.mxu0 0.0
        %1218 = vmatpush2.msra.mxu0 0.0
        %1219 = vmatprep.subr.mxu0 0.0
        %1220 = vmatpush2.msra.mxu0 0.0
        %1221 = vmatprep.subr.mxu0 0.0
        %1222 = vmatpush2.msra.mxu0 0.0
        %1223 = vmatprep.subr.mxu0 0.0
        %1224 = vmatpush2.msra.mxu0 0.0
        %1225 = vmatprep.subr.mxu0 0.0
        %1226 = vmatpush2.msra.mxu0 0.0
        %1227 = vmatprep.subr.mxu0 0.0
        %1228 = vmatpush2.msra.mxu0 0.0
        %1229 = vmatprep.subr.mxu0 0.0
        %1230 = vmatpush2.msra.mxu0 0.0
        %1231 = vmatprep.subr.mxu0 0.0
        %1232 = vmatpush2.msra.mxu0 0.0
        %1233 = vmatprep.subr.mxu0 0.0
        %1234 = vmatpush2.msra.mxu0 0.0
        %1235 = vmatprep.subr.mxu0 0.0
        %1236 = vmatpush2.msra.mxu0 0.0
        %1237 = vmatprep.mubr.f32.mxu0 0.0
        %1238 = vmatmul.mubr.f32.gmra.mxu0 %v1171
        %v1239 = vpop.f32.mrf.mxu0
        %v1240 = vadd.f32 0.0, %v1239
        %v1241 = vpop.f32.mrf.mxu0
        %1242 = vdwg.mxu0
        %v1244 = vsel %vm839, %v999, 0
        %1246 = vmatprep.subr.mxu0 0.0
        %1247 = vmatpush1.msra.mxu0 0.0
        %1248 = vmatprep.subr.mxu0 0.0
        %1249 = vmatpush1.msra.mxu0 0.0
        %1250 = vmatprep.subr.mxu0 0.0
        %1251 = vmatpush1.msra.mxu0 0.0
        %1252 = vmatprep.subr.mxu0 0.0
        %1253 = vmatpush1.msra.mxu0 0.0
        %1254 = vmatprep.subr.mxu0 0.0
        %1255 = vmatpush1.msra.mxu0 0.0
        %1256 = vmatprep.subr.mxu0 0.0
        %1257 = vmatpush1.msra.mxu0 0.0
        %1258 = vmatprep.subr.mxu0 0.0
        %1259 = vmatpush1.msra.mxu0 0.0
        %1260 = vmatprep.subr.mxu0 0.0
        %1261 = vmatpush1.msra.mxu0 0.0
        %1262 = vmatprep.subr.mxu0 0.0
        %1263 = vmatpush1.msra.mxu0 0.0
        %1264 = vmatprep.subr.mxu0 0.0
        %1265 = vmatpush1.msra.mxu0 0.0
        %1266 = vmatprep.subr.mxu0 0.0
        %1267 = vmatpush1.msra.mxu0 0.0
        %1268 = vmatprep.subr.mxu0 0.0
        %1269 = vmatpush1.msra.mxu0 0.0
        %1270 = vmatprep.subr.mxu0 0.0
        %1271 = vmatpush1.msra.mxu0 0.0
        %1272 = vmatprep.subr.mxu0 0.0
        %1273 = vmatpush1.msra.mxu0 0.0
        %1274 = vmatprep.subr.mxu0 0.0
        %1275 = vmatpush1.msra.mxu0 %v831
        %1276 = vmatprep.subr.mxu0 0.0
        %1277 = vmatpush1.msra.mxu0 %v830
        %1278 = vmatprep.subr.mxu0 0.0
        %1279 = vmatpush2.msra.mxu0 0.0
        %1280 = vmatprep.subr.mxu0 0.0
        %1281 = vmatpush2.msra.mxu0 0.0
        %1282 = vmatprep.subr.mxu0 0.0
        %1283 = vmatpush2.msra.mxu0 0.0
        %1284 = vmatprep.subr.mxu0 0.0
        %1285 = vmatpush2.msra.mxu0 0.0
        %1286 = vmatprep.subr.mxu0 0.0
        %1287 = vmatpush2.msra.mxu0 0.0
        %1288 = vmatprep.subr.mxu0 0.0
        %1289 = vmatpush2.msra.mxu0 0.0
        %1290 = vmatprep.subr.mxu0 0.0
        %1291 = vmatpush2.msra.mxu0 0.0
        %1292 = vmatprep.subr.mxu0 0.0
        %1293 = vmatpush2.msra.mxu0 0.0
        %1294 = vmatprep.subr.mxu0 0.0
        %1295 = vmatpush2.msra.mxu0 0.0
        %1296 = vmatprep.subr.mxu0 0.0
        %1297 = vmatpush2.msra.mxu0 0.0
        %1298 = vmatprep.subr.mxu0 0.0
        %1299 = vmatpush2.msra.mxu0 0.0
        %1300 = vmatprep.subr.mxu0 0.0
        %1301 = vmatpush2.msra.mxu0 0.0
        %1302 = vmatprep.subr.mxu0 0.0
        %1303 = vmatpush2.msra.mxu0 0.0
        %1304 = vmatprep.subr.mxu0 0.0
        %1305 = vmatpush2.msra.mxu0 0.0
        %1306 = vmatprep.subr.mxu0 0.0
        %1307 = vmatpush2.msra.mxu0 0.0
        %1308 = vmatprep.subr.mxu0 0.0
        %1309 = vmatpush2.msra.mxu0 0.0
        %1310 = vmatprep.mubr.f32.mxu0 0.0
        %1311 = vmatmul.mubr.f32.gmra.mxu0 %v1244
        %v1312 = vpop.f32.mrf.mxu0
        %v1313 = vadd.f32 %v1240, %v1312
        %v1314 = vpop.f32.mrf.mxu0
        %1315 = vdwg.mxu0
        %1316 = vrot.lane.b32.xlu0 %v838, 96
        %v1317 = vpop.permute.xlu0 %1316
        %1318 = vrot.lane.b32.xlu0 %v746, 96
        %v1319 = vpop.permute.xlu0 %1318
        %v1320 = vsel %vm839, %v1317, 0
        %v1322 = vsel %vm839, %v1319, 0
        %1324 = vmatprep.subr.mxu0 0.0
        %1325 = vmatpush1.xpose.msra.mxu0 0.0
        %1326 = vmatprep.subr.mxu0 0.0
        %1327 = vmatpush1.xpose.msra.mxu0 0.0
        %1328 = vmatprep.subr.mxu0 0.0
        %1329 = vmatpush1.xpose.msra.mxu0 0.0
        %1330 = vmatprep.subr.mxu0 0.0
        %1331 = vmatpush1.xpose.msra.mxu0 0.0
        %1332 = vmatprep.subr.mxu0 0.0
        %1333 = vmatpush1.xpose.msra.mxu0 0.0
        %1334 = vmatprep.subr.mxu0 0.0
        %1335 = vmatpush1.xpose.msra.mxu0 0.0
        %1336 = vmatprep.subr.mxu0 0.0
        %1337 = vmatpush1.xpose.msra.mxu0 0.0
        %1338 = vmatprep.subr.mxu0 0.0
        %1339 = vmatpush1.xpose.msra.mxu0 0.0
        %1340 = vmatprep.subr.mxu0 0.0
        %1341 = vmatpush1.xpose.msra.mxu0 0.0
        %1342 = vmatprep.subr.mxu0 0.0
        %1343 = vmatpush1.xpose.msra.mxu0 0.0
        %1344 = vmatprep.subr.mxu0 0.0
        %1345 = vmatpush1.xpose.msra.mxu0 0.0
        %1346 = vmatprep.subr.mxu0 0.0
        %1347 = vmatpush1.xpose.msra.mxu0 0.0
        %1348 = vmatprep.subr.mxu0 0.0
        %1349 = vmatpush1.xpose.msra.mxu0 0.0
        %1350 = vmatprep.subr.mxu0 0.0
        %1351 = vmatpush1.xpose.msra.mxu0 0.0
        %1352 = vmatprep.subr.mxu0 0.0
        %1353 = vmatpush1.xpose.msra.mxu0 0.0
        %1354 = vmatprep.subr.mxu0 0.0
        %1355 = vmatpush1.xpose.msra.mxu0 %v1322
        %1356 = vmatprep.subr.mxu0 0.0
        %1357 = vmatpush2.xpose.msra.mxu0 0.0
        %1358 = vmatprep.subr.mxu0 0.0
        %1359 = vmatpush2.xpose.msra.mxu0 0.0
        %1360 = vmatprep.subr.mxu0 0.0
        %1361 = vmatpush2.xpose.msra.mxu0 0.0
        %1362 = vmatprep.subr.mxu0 0.0
        %1363 = vmatpush2.xpose.msra.mxu0 0.0
        %1364 = vmatprep.subr.mxu0 0.0
        %1365 = vmatpush2.xpose.msra.mxu0 0.0
        %1366 = vmatprep.subr.mxu0 0.0
        %1367 = vmatpush2.xpose.msra.mxu0 0.0
        %1368 = vmatprep.subr.mxu0 0.0
        %1369 = vmatpush2.xpose.msra.mxu0 0.0
        %1370 = vmatprep.subr.mxu0 0.0
        %1371 = vmatpush2.xpose.msra.mxu0 0.0
        %1372 = vmatprep.subr.mxu0 0.0
        %1373 = vmatpush2.xpose.msra.mxu0 0.0
        %1374 = vmatprep.subr.mxu0 0.0
        %1375 = vmatpush2.xpose.msra.mxu0 0.0
        %1376 = vmatprep.subr.mxu0 0.0
        %1377 = vmatpush2.xpose.msra.mxu0 0.0
        %1378 = vmatprep.subr.mxu0 0.0
        %1379 = vmatpush2.xpose.msra.mxu0 0.0
        %1380 = vmatprep.subr.mxu0 0.0
        %1381 = vmatpush2.xpose.msra.mxu0 0.0
        %1382 = vmatprep.subr.mxu0 0.0
        %1383 = vmatpush2.xpose.msra.mxu0 0.0
        %1384 = vmatprep.subr.mxu0 0.0
        %1385 = vmatpush2.xpose.msra.mxu0 0.0
        %1386 = vmatprep.subr.mxu0 0.0
        %1387 = vmatpush2.xpose.msra.mxu0 0.0
        %1388 = vmatprep.mubr.f32.mxu0 0.0
        %1389 = vmatmul.mubr.f32.gmra.mxu0 %v1320
        %v1390 = vpop.f32.mrf.mxu0
        %v1391 = vadd.f32 0.0, %v1390
        %v1392 = vpop.f32.mrf.mxu0
        %1393 = vdwg.mxu0
        %v1394 = vsel %vm916, %v1391, -inf
        %1395 = vmax.xlane.f32.xlu0 %v1394
        %v1396 = vpop.xlane.xlu0 %1395
        %v1397 = vsub.f32 %v1391, %v1396
        %v1398 = vmul.f32 %v1397, 1.442695
        %v1399 = vpow.pop %v1398
        %v1400 = vsel %vm916, %v1399, 0.0
        %1401 = vadd.xlane.f32.xlu0 %v1400
        %v1402 = vpop.xlane.xlu0 %1401
        %v1403 = vrcp.pop %v1402
        %v1404 = vmul.f32 %v1399, %v1403
        %s1405 = scalar_lea.vmem %s577, 16 [#allocation4]
        %1406 = vst.msk [vmem:[%s1405] sm:$0xff] %vm916, %v1404
        %1407 = vrot.lane.b32.xlu0 %v827, 96
        %v1408 = vpop.permute.xlu0 %1407
        %v1411 = vsel %vm916, %v1404, 0
        %1413 = vmatprep.subr.mxu0 0.0
        %1414 = vmatpush1.msra.mxu0 0.0
        %1415 = vmatprep.subr.mxu0 0.0
        %1416 = vmatpush1.msra.mxu0 0.0
        %1417 = vmatprep.subr.mxu0 0.0
        %1418 = vmatpush1.msra.mxu0 0.0
        %1419 = vmatprep.subr.mxu0 0.0
        %1420 = vmatpush1.msra.mxu0 0.0
        %1421 = vmatprep.subr.mxu0 0.0
        %1422 = vmatpush1.msra.mxu0 0.0
        %1423 = vmatprep.subr.mxu0 0.0
        %1424 = vmatpush1.msra.mxu0 0.0
        %1425 = vmatprep.subr.mxu0 0.0
        %1426 = vmatpush1.msra.mxu0 0.0
        %1427 = vmatprep.subr.mxu0 0.0
        %1428 = vmatpush1.msra.mxu0 0.0
        %1429 = vmatprep.subr.mxu0 0.0
        %1430 = vmatpush1.msra.mxu0 0.0
        %1431 = vmatprep.subr.mxu0 0.0
        %1432 = vmatpush1.msra.mxu0 0.0
        %1433 = vmatprep.subr.mxu0 0.0
        %1434 = vmatpush1.msra.mxu0 0.0
        %1435 = vmatprep.subr.mxu0 0.0
        %1436 = vmatpush1.msra.mxu0 0.0
        %1437 = vmatprep.subr.mxu0 0.0
        %1438 = vmatpush1.msra.mxu0 0.0
        %1439 = vmatprep.subr.mxu0 0.0
        %1440 = vmatpush1.msra.mxu0 0.0
        %1441 = vmatprep.subr.mxu0 0.0
        %1442 = vmatpush1.msra.mxu0 0.0
        %1443 = vmatprep.subr.mxu0 0.0
        %1444 = vmatpush1.msra.mxu0 %v1408
        %1445 = vmatprep.subr.mxu0 0.0
        %1446 = vmatpush2.msra.mxu0 0.0
        %1447 = vmatprep.subr.mxu0 0.0
        %1448 = vmatpush2.msra.mxu0 0.0
        %1449 = vmatprep.subr.mxu0 0.0
        %1450 = vmatpush2.msra.mxu0 0.0
        %1451 = vmatprep.subr.mxu0 0.0
        %1452 = vmatpush2.msra.mxu0 0.0
        %1453 = vmatprep.subr.mxu0 0.0
        %1454 = vmatpush2.msra.mxu0 0.0
        %1455 = vmatprep.subr.mxu0 0.0
        %1456 = vmatpush2.msra.mxu0 0.0
        %1457 = vmatprep.subr.mxu0 0.0
        %1458 = vmatpush2.msra.mxu0 0.0
        %1459 = vmatprep.subr.mxu0 0.0
        %1460 = vmatpush2.msra.mxu0 0.0
        %1461 = vmatprep.subr.mxu0 0.0
        %1462 = vmatpush2.msra.mxu0 0.0
        %1463 = vmatprep.subr.mxu0 0.0
        %1464 = vmatpush2.msra.mxu0 0.0
        %1465 = vmatprep.subr.mxu0 0.0
        %1466 = vmatpush2.msra.mxu0 0.0
        %1467 = vmatprep.subr.mxu0 0.0
        %1468 = vmatpush2.msra.mxu0 0.0
        %1469 = vmatprep.subr.mxu0 0.0
        %1470 = vmatpush2.msra.mxu0 0.0
        %1471 = vmatprep.subr.mxu0 0.0
        %1472 = vmatpush2.msra.mxu0 0.0
        %1473 = vmatprep.subr.mxu0 0.0
        %1474 = vmatpush2.msra.mxu0 0.0
        %1475 = vmatprep.subr.mxu0 0.0
        %1476 = vmatpush2.msra.mxu0 0.0
        %1477 = vmatprep.mubr.f32.mxu0 0.0
        %1478 = vmatmul.mubr.f32.gmra.mxu0 %v1411
        %v1479 = vpop.f32.mrf.mxu0
        %v1480 = vadd.f32 0.0, %v1479
        %v1481 = vpop.f32.mrf.mxu0
        %1482 = vdwg.mxu0
        %v1484 = vsel %vm839, %v1480, 0
        %1486 = vmatprep.subr.mxu0 0.0
        %1487 = vmatpush1.msra.mxu0 0.0
        %1488 = vmatprep.subr.mxu0 0.0
        %1489 = vmatpush1.msra.mxu0 0.0
        %1490 = vmatprep.subr.mxu0 0.0
        %1491 = vmatpush1.msra.mxu0 0.0
        %1492 = vmatprep.subr.mxu0 0.0
        %1493 = vmatpush1.msra.mxu0 0.0
        %1494 = vmatprep.subr.mxu0 0.0
        %1495 = vmatpush1.msra.mxu0 0.0
        %1496 = vmatprep.subr.mxu0 0.0
        %1497 = vmatpush1.msra.mxu0 0.0
        %1498 = vmatprep.subr.mxu0 0.0
        %1499 = vmatpush1.msra.mxu0 0.0
        %1500 = vmatprep.subr.mxu0 0.0
        %1501 = vmatpush1.msra.mxu0 0.0
        %1502 = vmatprep.subr.mxu0 0.0
        %1503 = vmatpush1.msra.mxu0 0.0
        %1504 = vmatprep.subr.mxu0 0.0
        %1505 = vmatpush1.msra.mxu0 0.0
        %1506 = vmatprep.subr.mxu0 0.0
        %1507 = vmatpush1.msra.mxu0 0.0
        %1508 = vmatprep.subr.mxu0 0.0
        %1509 = vmatpush1.msra.mxu0 0.0
        %1510 = vmatprep.subr.mxu0 0.0
        %1511 = vmatpush1.msra.mxu0 0.0
        %1512 = vmatprep.subr.mxu0 0.0
        %1513 = vmatpush1.msra.mxu0 0.0
        %1514 = vmatprep.subr.mxu0 0.0
        %1515 = vmatpush1.msra.mxu0 %v835
        %1516 = vmatprep.subr.mxu0 0.0
        %1517 = vmatpush1.msra.mxu0 %v834
        %1518 = vmatprep.subr.mxu0 0.0
        %1519 = vmatpush2.msra.mxu0 0.0
        %1520 = vmatprep.subr.mxu0 0.0
        %1521 = vmatpush2.msra.mxu0 0.0
        %1522 = vmatprep.subr.mxu0 0.0
        %1523 = vmatpush2.msra.mxu0 0.0
        %1524 = vmatprep.subr.mxu0 0.0
        %1525 = vmatpush2.msra.mxu0 0.0
        %1526 = vmatprep.subr.mxu0 0.0
        %1527 = vmatpush2.msra.mxu0 0.0
        %1528 = vmatprep.subr.mxu0 0.0
        %1529 = vmatpush2.msra.mxu0 0.0
        %1530 = vmatprep.subr.mxu0 0.0
        %1531 = vmatpush2.msra.mxu0 0.0
        %1532 = vmatprep.subr.mxu0 0.0
        %1533 = vmatpush2.msra.mxu0 0.0
        %1534 = vmatprep.subr.mxu0 0.0
        %1535 = vmatpush2.msra.mxu0 0.0
        %1536 = vmatprep.subr.mxu0 0.0
        %1537 = vmatpush2.msra.mxu0 0.0
        %1538 = vmatprep.subr.mxu0 0.0
        %1539 = vmatpush2.msra.mxu0 0.0
        %1540 = vmatprep.subr.mxu0 0.0
        %1541 = vmatpush2.msra.mxu0 0.0
        %1542 = vmatprep.subr.mxu0 0.0
        %1543 = vmatpush2.msra.mxu0 0.0
        %1544 = vmatprep.subr.mxu0 0.0
        %1545 = vmatpush2.msra.mxu0 0.0
        %1546 = vmatprep.subr.mxu0 0.0
        %1547 = vmatpush2.msra.mxu0 0.0
        %1548 = vmatprep.subr.mxu0 0.0
        %1549 = vmatpush2.msra.mxu0 0.0
        %1550 = vmatprep.mubr.f32.mxu0 0.0
        %1551 = vmatmul.mubr.f32.gmra.mxu0 %v1484
        %v1552 = vpop.f32.mrf.mxu0
        %v1553 = vadd.f32 0.0, %v1552
        %v1554 = vpop.f32.mrf.mxu0
        %1555 = vdwg.mxu0
        %v1556 = vadd.f32 %v1313, %v1553
        %1557 = vrot.lane.b32.xlu0 %v838, 80
        %v1558 = vpop.permute.xlu0 %1557
        %1559 = vrot.lane.b32.xlu0 %v746, 80
        %v1560 = vpop.permute.xlu0 %1559
        %v1561 = vsel %vm839, %v1558, 0
        %v1563 = vsel %vm839, %v1560, 0
        %1565 = vmatprep.subr.mxu0 0.0
        %1566 = vmatpush1.xpose.msra.mxu0 0.0
        %1567 = vmatprep.subr.mxu0 0.0
        %1568 = vmatpush1.xpose.msra.mxu0 0.0
        %1569 = vmatprep.subr.mxu0 0.0
        %1570 = vmatpush1.xpose.msra.mxu0 0.0
        %1571 = vmatprep.subr.mxu0 0.0
        %1572 = vmatpush1.xpose.msra.mxu0 0.0
        %1573 = vmatprep.subr.mxu0 0.0
        %1574 = vmatpush1.xpose.msra.mxu0 0.0
        %1575 = vmatprep.subr.mxu0 0.0
        %1576 = vmatpush1.xpose.msra.mxu0 0.0
        %1577 = vmatprep.subr.mxu0 0.0
        %1578 = vmatpush1.xpose.msra.mxu0 0.0
        %1579 = vmatprep.subr.mxu0 0.0
        %1580 = vmatpush1.xpose.msra.mxu0 0.0
        %1581 = vmatprep.subr.mxu0 0.0
        %1582 = vmatpush1.xpose.msra.mxu0 0.0
        %1583 = vmatprep.subr.mxu0 0.0
        %1584 = vmatpush1.xpose.msra.mxu0 0.0
        %1585 = vmatprep.subr.mxu0 0.0
        %1586 = vmatpush1.xpose.msra.mxu0 0.0
        %1587 = vmatprep.subr.mxu0 0.0
        %1588 = vmatpush1.xpose.msra.mxu0 0.0
        %1589 = vmatprep.subr.mxu0 0.0
        %1590 = vmatpush1.xpose.msra.mxu0 0.0
        %1591 = vmatprep.subr.mxu0 0.0
        %1592 = vmatpush1.xpose.msra.mxu0 0.0
        %1593 = vmatprep.subr.mxu0 0.0
        %1594 = vmatpush1.xpose.msra.mxu0 0.0
        %1595 = vmatprep.subr.mxu0 0.0
        %1596 = vmatpush1.xpose.msra.mxu0 %v1563
        %1597 = vmatprep.subr.mxu0 0.0
        %1598 = vmatpush2.xpose.msra.mxu0 0.0
        %1599 = vmatprep.subr.mxu0 0.0
        %1600 = vmatpush2.xpose.msra.mxu0 0.0
        %1601 = vmatprep.subr.mxu0 0.0
        %1602 = vmatpush2.xpose.msra.mxu0 0.0
        %1603 = vmatprep.subr.mxu0 0.0
        %1604 = vmatpush2.xpose.msra.mxu0 0.0
        %1605 = vmatprep.subr.mxu0 0.0
        %1606 = vmatpush2.xpose.msra.mxu0 0.0
        %1607 = vmatprep.subr.mxu0 0.0
        %1608 = vmatpush2.xpose.msra.mxu0 0.0
        %1609 = vmatprep.subr.mxu0 0.0
        %1610 = vmatpush2.xpose.msra.mxu0 0.0
        %1611 = vmatprep.subr.mxu0 0.0
        %1612 = vmatpush2.xpose.msra.mxu0 0.0
        %1613 = vmatprep.subr.mxu0 0.0
        %1614 = vmatpush2.xpose.msra.mxu0 0.0
        %1615 = vmatprep.subr.mxu0 0.0
        %1616 = vmatpush2.xpose.msra.mxu0 0.0
        %1617 = vmatprep.subr.mxu0 0.0
        %1618 = vmatpush2.xpose.msra.mxu0 0.0
        %1619 = vmatprep.subr.mxu0 0.0
        %1620 = vmatpush2.xpose.msra.mxu0 0.0
        %1621 = vmatprep.subr.mxu0 0.0
        %1622 = vmatpush2.xpose.msra.mxu0 0.0
        %1623 = vmatprep.subr.mxu0 0.0
        %1624 = vmatpush2.xpose.msra.mxu0 0.0
        %1625 = vmatprep.subr.mxu0 0.0
        %1626 = vmatpush2.xpose.msra.mxu0 0.0
        %1627 = vmatprep.subr.mxu0 0.0
        %1628 = vmatpush2.xpose.msra.mxu0 0.0
        %1629 = vmatprep.mubr.f32.mxu0 0.0
        %1630 = vmatmul.mubr.f32.gmra.mxu0 %v1561
        %v1631 = vpop.f32.mrf.mxu0
        %v1632 = vadd.f32 0.0, %v1631
        %v1633 = vpop.f32.mrf.mxu0
        %1634 = vdwg.mxu0
        %v1635 = vsel %vm916, %v1632, -inf
        %1636 = vmax.xlane.f32.xlu0 %v1635
        %v1637 = vpop.xlane.xlu0 %1636
        %v1638 = vsub.f32 %v1632, %v1637
        %v1639 = vmul.f32 %v1638, 1.442695
        %v1640 = vpow.pop %v1639
        %v1641 = vsel %vm916, %v1640, 0.0
        %1642 = vadd.xlane.f32.xlu0 %v1641
        %v1643 = vpop.xlane.xlu0 %1642
        %v1644 = vrcp.pop %v1643
        %v1645 = vmul.f32 %v1640, %v1644
        %s1646 = scalar_lea.vmem %s577, 24 [#allocation4]
        %1647 = vst.msk [vmem:[%s1646] sm:$0xff] %vm916, %v1645
        %1648 = vrot.lane.b32.xlu0 %v827, 80
        %v1649 = vpop.permute.xlu0 %1648
        %v1652 = vsel %vm916, %v1645, 0
        %1654 = vmatprep.subr.mxu0 0.0
        %1655 = vmatpush1.msra.mxu0 0.0
        %1656 = vmatprep.subr.mxu0 0.0
        %1657 = vmatpush1.msra.mxu0 0.0
        %1658 = vmatprep.subr.mxu0 0.0
        %1659 = vmatpush1.msra.mxu0 0.0
        %1660 = vmatprep.subr.mxu0 0.0
        %1661 = vmatpush1.msra.mxu0 0.0
        %1662 = vmatprep.subr.mxu0 0.0
        %1663 = vmatpush1.msra.mxu0 0.0
        %1664 = vmatprep.subr.mxu0 0.0
        %1665 = vmatpush1.msra.mxu0 0.0
        %1666 = vmatprep.subr.mxu0 0.0
        %1667 = vmatpush1.msra.mxu0 0.0
        %1668 = vmatprep.subr.mxu0 0.0
        %1669 = vmatpush1.msra.mxu0 0.0
        %1670 = vmatprep.subr.mxu0 0.0
        %1671 = vmatpush1.msra.mxu0 0.0
        %1672 = vmatprep.subr.mxu0 0.0
        %1673 = vmatpush1.msra.mxu0 0.0
        %1674 = vmatprep.subr.mxu0 0.0
        %1675 = vmatpush1.msra.mxu0 0.0
        %1676 = vmatprep.subr.mxu0 0.0
        %1677 = vmatpush1.msra.mxu0 0.0
        %1678 = vmatprep.subr.mxu0 0.0
        %1679 = vmatpush1.msra.mxu0 0.0
        %1680 = vmatprep.subr.mxu0 0.0
        %1681 = vmatpush1.msra.mxu0 0.0
        %1682 = vmatprep.subr.mxu0 0.0
        %1683 = vmatpush1.msra.mxu0 0.0
        %1684 = vmatprep.subr.mxu0 0.0
        %1685 = vmatpush1.msra.mxu0 %v1649
        %1686 = vmatprep.subr.mxu0 0.0
        %1687 = vmatpush2.msra.mxu0 0.0
        %1688 = vmatprep.subr.mxu0 0.0
        %1689 = vmatpush2.msra.mxu0 0.0
        %1690 = vmatprep.subr.mxu0 0.0
        %1691 = vmatpush2.msra.mxu0 0.0
        %1692 = vmatprep.subr.mxu0 0.0
        %1693 = vmatpush2.msra.mxu0 0.0
        %1694 = vmatprep.subr.mxu0 0.0
        %1695 = vmatpush2.msra.mxu0 0.0
        %1696 = vmatprep.subr.mxu0 0.0
        %1697 = vmatpush2.msra.mxu0 0.0
        %1698 = vmatprep.subr.mxu0 0.0
        %1699 = vmatpush2.msra.mxu0 0.0
        %1700 = vmatprep.subr.mxu0 0.0
        %1701 = vmatpush2.msra.mxu0 0.0
        %1702 = vmatprep.subr.mxu0 0.0
        %1703 = vmatpush2.msra.mxu0 0.0
        %1704 = vmatprep.subr.mxu0 0.0
        %1705 = vmatpush2.msra.mxu0 0.0
        %1706 = vmatprep.subr.mxu0 0.0
        %1707 = vmatpush2.msra.mxu0 0.0
        %1708 = vmatprep.subr.mxu0 0.0
        %1709 = vmatpush2.msra.mxu0 0.0
        %1710 = vmatprep.subr.mxu0 0.0
        %1711 = vmatpush2.msra.mxu0 0.0
        %1712 = vmatprep.subr.mxu0 0.0
        %1713 = vmatpush2.msra.mxu0 0.0
        %1714 = vmatprep.subr.mxu0 0.0
        %1715 = vmatpush2.msra.mxu0 0.0
        %1716 = vmatprep.subr.mxu0 0.0
        %1717 = vmatpush2.msra.mxu0 0.0
        %1718 = vmatprep.mubr.f32.mxu0 0.0
        %1719 = vmatmul.mubr.f32.gmra.mxu0 %v1652
        %v1720 = vpop.f32.mrf.mxu0
        %v1721 = vadd.f32 0.0, %v1720
        %v1722 = vpop.f32.mrf.mxu0
        %1723 = vdwg.mxu0
        %v1725 = vsel %vm839, %v1721, 0
        %1727 = vmatprep.subr.mxu0 0.0
        %1728 = vmatpush1.msra.mxu0 0.0
        %1729 = vmatprep.subr.mxu0 0.0
        %1730 = vmatpush1.msra.mxu0 0.0
        %1731 = vmatprep.subr.mxu0 0.0
        %1732 = vmatpush1.msra.mxu0 0.0
        %1733 = vmatprep.subr.mxu0 0.0
        %1734 = vmatpush1.msra.mxu0 0.0
        %1735 = vmatprep.subr.mxu0 0.0
        %1736 = vmatpush1.msra.mxu0 0.0
        %1737 = vmatprep.subr.mxu0 0.0
        %1738 = vmatpush1.msra.mxu0 0.0
        %1739 = vmatprep.subr.mxu0 0.0
        %1740 = vmatpush1.msra.mxu0 0.0
        %1741 = vmatprep.subr.mxu0 0.0
        %1742 = vmatpush1.msra.mxu0 0.0
        %1743 = vmatprep.subr.mxu0 0.0
        %1744 = vmatpush1.msra.mxu0 0.0
        %1745 = vmatprep.subr.mxu0 0.0
        %1746 = vmatpush1.msra.mxu0 0.0
        %1747 = vmatprep.subr.mxu0 0.0
        %1748 = vmatpush1.msra.mxu0 0.0
        %1749 = vmatprep.subr.mxu0 0.0
        %1750 = vmatpush1.msra.mxu0 0.0
        %1751 = vmatprep.subr.mxu0 0.0
        %1752 = vmatpush1.msra.mxu0 0.0
        %1753 = vmatprep.subr.mxu0 0.0
        %1754 = vmatpush1.msra.mxu0 0.0
        %1755 = vmatprep.subr.mxu0 0.0
        %1756 = vmatpush1.msra.mxu0 %v837
        %1757 = vmatprep.subr.mxu0 0.0
        %1758 = vmatpush1.msra.mxu0 %v836
        %1759 = vmatprep.subr.mxu0 0.0
        %1760 = vmatpush2.msra.mxu0 0.0
        %1761 = vmatprep.subr.mxu0 0.0
        %1762 = vmatpush2.msra.mxu0 0.0
        %1763 = vmatprep.subr.mxu0 0.0
        %1764 = vmatpush2.msra.mxu0 0.0
        %1765 = vmatprep.subr.mxu0 0.0
        %1766 = vmatpush2.msra.mxu0 0.0
        %1767 = vmatprep.subr.mxu0 0.0
        %1768 = vmatpush2.msra.mxu0 0.0
        %1769 = vmatprep.subr.mxu0 0.0
        %1770 = vmatpush2.msra.mxu0 0.0
        %1771 = vmatprep.subr.mxu0 0.0
        %1772 = vmatpush2.msra.mxu0 0.0
        %1773 = vmatprep.subr.mxu0 0.0
        %1774 = vmatpush2.msra.mxu0 0.0
        %1775 = vmatprep.subr.mxu0 0.0
        %1776 = vmatpush2.msra.mxu0 0.0
        %1777 = vmatprep.subr.mxu0 0.0
        %1778 = vmatpush2.msra.mxu0 0.0
        %1779 = vmatprep.subr.mxu0 0.0
        %1780 = vmatpush2.msra.mxu0 0.0
        %1781 = vmatprep.subr.mxu0 0.0
        %1782 = vmatpush2.msra.mxu0 0.0
        %1783 = vmatprep.subr.mxu0 0.0
        %1784 = vmatpush2.msra.mxu0 0.0
        %1785 = vmatprep.subr.mxu0 0.0
        %1786 = vmatpush2.msra.mxu0 0.0
        %1787 = vmatprep.subr.mxu0 0.0
        %1788 = vmatpush2.msra.mxu0 0.0
        %1789 = vmatprep.subr.mxu0 0.0
        %1790 = vmatpush2.msra.mxu0 0.0
        %1791 = vmatprep.mubr.f32.mxu0 0.0
        %1792 = vmatmul.mubr.f32.gmra.mxu0 %v1725
        %v1793 = vpop.f32.mrf.mxu0
        %v1794 = vadd.f32 0.0, %v1793
        %v1795 = vpop.f32.mrf.mxu0
        %1796 = vdwg.mxu0
        %v1797 = vadd.f32 %v1556, %v1794
        %v1798 = vld [vmem:[%s8] sm:$0x1]
        %v1800 = vlaneseq
        %v1801 = vshrl.u32 %v1800, 7
        %v1802 = vsub.s32 0, %v1801
        %v1803 = vrot.slane %v1798, %v1802
        %v1805 = vadd.f32 %v1797, %v1803
        %v1806 = vadd.f32 %v1805, %v582
        %v1807 = vld [vmem:[%s9] sm:$0x1]
        %v1808 = vld [vmem:[%s10] sm:$0x1]
        %v1809 = vsel %vm594, %v1806, 0.0
        %1810 = vadd.xlane.f32.xlu0 %v1809
        %v1811 = vpop.xlane.xlu0 %1810
        %v1812 = vrcp.pop 32.0
        %v1813 = vmul.f32 %v1811, %v1812
        %v1814 = vsub.f32 %v1806, %v1813
        %v1815 = vmul.f32 %v1814, %v1814
        %v1816 = vsel %vm594, %v1815, 0.0
        %1817 = vadd.xlane.f32.xlu0 %v1816
        %v1818 = vpop.xlane.xlu0 %1817
        %v1819 = vmul.f32 %v1818, %v1812
        %v1820 = vadd.f32 %v1819, 1e-05
        %v1821 = vrsqrt.pop %v1820
        %v1822 = vmul.f32 %v1814, %v1821
        %v1824 = vlaneseq
        %v1825 = vshrl.u32 %v1824, 7
        %v1826 = vsub.s32 0, %v1825
        %v1827 = vrot.slane %v1807, %v1826
        %v1829 = vmul.f32 %v1822, %v1827
        %v1831 = vlaneseq
        %v1832 = vshrl.u32 %v1831, 7
        %v1833 = vsub.s32 0, %v1832
        %v1834 = vrot.slane %v1808, %v1833
        %v1836 = vadd.f32 %v1829, %v1834
        %v1837 = vld [vmem:[%s11] sm:$0xff]
        %v1838 = vld [vmem:[%s11 + $0x8] sm:$0xff]
        %v1839 = vld [vmem:[%s11 + $0x10] sm:$0xff]
        %v1840 = vld [vmem:[%s11 + $0x18] sm:$0xff]
        %v1841 = vld [vmem:[%s12] sm:$0x1]
        %v1843 = vlaneseq
        %v1844 = vshrl.u32 %v1843, 7
        %v1845 = vsub.s32 0, %v1844
        %v1846 = vrot.slane %v1841, %v1845
        %v1849 = vsel %vm594, %v1836, 0
        %1851 = vmatprep.subr.mxu0 0.0
        %1852 = vmatpush1.msra.mxu0 0.0
        %1853 = vmatprep.subr.mxu0 0.0
        %1854 = vmatpush1.msra.mxu0 0.0
        %1855 = vmatprep.subr.mxu0 0.0
        %1856 = vmatpush1.msra.mxu0 0.0
        %1857 = vmatprep.subr.mxu0 0.0
        %1858 = vmatpush1.msra.mxu0 0.0
        %1859 = vmatprep.subr.mxu0 0.0
        %1860 = vmatpush1.msra.mxu0 0.0
        %1861 = vmatprep.subr.mxu0 0.0
        %1862 = vmatpush1.msra.mxu0 0.0
        %1863 = vmatprep.subr.mxu0 0.0
        %1864 = vmatpush1.msra.mxu0 0.0
        %1865 = vmatprep.subr.mxu0 0.0
        %1866 = vmatpush1.msra.mxu0 0.0
        %1867 = vmatprep.subr.mxu0 0.0
        %1868 = vmatpush1.msra.mxu0 0.0
        %1869 = vmatprep.subr.mxu0 0.0
        %1870 = vmatpush1.msra.mxu0 0.0
        %1871 = vmatprep.subr.mxu0 0.0
        %1872 = vmatpush1.msra.mxu0 0.0
        %1873 = vmatprep.subr.mxu0 0.0
        %1874 = vmatpush1.msra.mxu0 0.0
        %1875 = vmatprep.subr.mxu0 0.0
        %1876 = vmatpush1.msra.mxu0 %v1840
        %1877 = vmatprep.subr.mxu0 0.0
        %1878 = vmatpush1.msra.mxu0 %v1839
        %1879 = vmatprep.subr.mxu0 0.0
        %1880 = vmatpush1.msra.mxu0 %v1838
        %1881 = vmatprep.subr.mxu0 0.0
        %1882 = vmatpush1.msra.mxu0 %v1837
        %1883 = vmatprep.subr.mxu0 0.0
        %1884 = vmatpush2.msra.mxu0 0.0
        %1885 = vmatprep.subr.mxu0 0.0
        %1886 = vmatpush2.msra.mxu0 0.0
        %1887 = vmatprep.subr.mxu0 0.0
        %1888 = vmatpush2.msra.mxu0 0.0
        %1889 = vmatprep.subr.mxu0 0.0
        %1890 = vmatpush2.msra.mxu0 0.0
        %1891 = vmatprep.subr.mxu0 0.0
        %1892 = vmatpush2.msra.mxu0 0.0
        %1893 = vmatprep.subr.mxu0 0.0
        %1894 = vmatpush2.msra.mxu0 0.0
        %1895 = vmatprep.subr.mxu0 0.0
        %1896 = vmatpush2.msra.mxu0 0.0
        %1897 = vmatprep.subr.mxu0 0.0
        %1898 = vmatpush2.msra.mxu0 0.0
        %1899 = vmatprep.subr.mxu0 0.0
        %1900 = vmatpush2.msra.mxu0 0.0
        %1901 = vmatprep.subr.mxu0 0.0
        %1902 = vmatpush2.msra.mxu0 0.0
        %1903 = vmatprep.subr.mxu0 0.0
        %1904 = vmatpush2.msra.mxu0 0.0
        %1905 = vmatprep.subr.mxu0 0.0
        %1906 = vmatpush2.msra.mxu0 0.0
        %1907 = vmatprep.subr.mxu0 0.0
        %1908 = vmatpush2.msra.mxu0 0.0
        %1909 = vmatprep.subr.mxu0 0.0
        %1910 = vmatpush2.msra.mxu0 0.0
        %1911 = vmatprep.subr.mxu0 0.0
        %1912 = vmatpush2.msra.mxu0 0.0
        %1913 = vmatprep.subr.mxu0 0.0
        %1914 = vmatpush2.msra.mxu0 0.0
        %1915 = vmatprep.mubr.f32.mxu0 0.0
        %1916 = vmatmul.mubr.f32.gmra.mxu0 %v1849
        %v1917 = vpop.f32.mrf.mxu0
        %v1918 = vadd.f32 %v1846, %v1917
        %v1919 = vpop.f32.mrf.mxu0
        %1920 = vdwg.mxu0
        %v1921 = vmax.f32 %v1918, 0.0
        %v1922 = vld [vmem:[%s13] sm:$0xff]
        %v1923 = vld [vmem:[%s13 + $0x8] sm:$0xff]
        %v1924 = vld [vmem:[%s13 + $0x10] sm:$0xff]
        %v1925 = vld [vmem:[%s13 + $0x18] sm:$0xff]
        %v1926 = vld [vmem:[%s13 + $0x20] sm:$0xff]
        %v1927 = vld [vmem:[%s13 + $0x28] sm:$0xff]
        %v1928 = vld [vmem:[%s13 + $0x30] sm:$0xff]
        %v1929 = vld [vmem:[%s13 + $0x38] sm:$0xff]
        %v1930 = vld [vmem:[%s14] sm:$0x1]
        %v1932 = vlaneseq
        %v1933 = vshrl.u32 %v1932, 7
        %v1934 = vsub.s32 0, %v1933
        %v1935 = vrot.slane %v1930, %v1934
        %vm1937 = vcmask 523264
        %v1939 = vsel %vm1937, %v1921, 0
        %1941 = vmatprep.subr.mxu0 0.0
        %1942 = vmatpush1.msra.mxu0 0.0
        %1943 = vmatprep.subr.mxu0 0.0
        %1944 = vmatpush1.msra.mxu0 0.0
        %1945 = vmatprep.subr.mxu0 0.0
        %1946 = vmatpush1.msra.mxu0 0.0
        %1947 = vmatprep.subr.mxu0 0.0
        %1948 = vmatpush1.msra.mxu0 0.0
        %1949 = vmatprep.subr.mxu0 0.0
        %1950 = vmatpush1.msra.mxu0 0.0
        %1951 = vmatprep.subr.mxu0 0.0
        %1952 = vmatpush1.msra.mxu0 0.0
        %1953 = vmatprep.subr.mxu0 0.0
        %1954 = vmatpush1.msra.mxu0 0.0
        %1955 = vmatprep.subr.mxu0 0.0
        %1956 = vmatpush1.msra.mxu0 0.0
        %1957 = vmatprep.subr.mxu0 0.0
        %1958 = vmatpush1.msra.mxu0 %v1929
        %1959 = vmatprep.subr.mxu0 0.0
        %1960 = vmatpush1.msra.mxu0 %v1928
        %1961 = vmatprep.subr.mxu0 0.0
        %1962 = vmatpush1.msra.mxu0 %v1927
        %1963 = vmatprep.subr.mxu0 0.0
        %1964 = vmatpush1.msra.mxu0 %v1926
        %1965 = vmatprep.subr.mxu0 0.0
        %1966 = vmatpush1.msra.mxu0 %v1925
        %1967 = vmatprep.subr.mxu0 0.0
        %1968 = vmatpush1.msra.mxu0 %v1924
        %1969 = vmatprep.subr.mxu0 0.0
        %1970 = vmatpush1.msra.mxu0 %v1923
        %1971 = vmatprep.subr.mxu0 0.0
        %1972 = vmatpush1.msra.mxu0 %v1922
        %1973 = vmatprep.subr.mxu0 0.0
        %1974 = vmatpush2.msra.mxu0 0.0
        %1975 = vmatprep.subr.mxu0 0.0
        %1976 = vmatpush2.msra.mxu0 0.0
        %1977 = vmatprep.subr.mxu0 0.0
        %1978 = vmatpush2.msra.mxu0 0.0
        %1979 = vmatprep.subr.mxu0 0.0
        %1980 = vmatpush2.msra.mxu0 0.0
        %1981 = vmatprep.subr.mxu0 0.0
        %1982 = vmatpush2.msra.mxu0 0.0
        %1983 = vmatprep.subr.mxu0 0.0
        %1984 = vmatpush2.msra.mxu0 0.0
        %1985 = vmatprep.subr.mxu0 0.0
        %1986 = vmatpush2.msra.mxu0 0.0
        %1987 = vmatprep.subr.mxu0 0.0
        %1988 = vmatpush2.msra.mxu0 0.0
        %1989 = vmatprep.subr.mxu0 0.0
        %1990 = vmatpush2.msra.mxu0 0.0
        %1991 = vmatprep.subr.mxu0 0.0
        %1992 = vmatpush2.msra.mxu0 0.0
        %1993 = vmatprep.subr.mxu0 0.0
        %1994 = vmatpush2.msra.mxu0 0.0
        %1995 = vmatprep.subr.mxu0 0.0
        %1996 = vmatpush2.msra.mxu0 0.0
        %1997 = vmatprep.subr.mxu0 0.0
        %1998 = vmatpush2.msra.mxu0 0.0
        %1999 = vmatprep.subr.mxu0 0.0
        %2000 = vmatpush2.msra.mxu0 0.0
        %2001 = vmatprep.subr.mxu0 0.0
        %2002 = vmatpush2.msra.mxu0 0.0
        %2003 = vmatprep.subr.mxu0 0.0
        %2004 = vmatpush2.msra.mxu0 0.0
        %2005 = vmatprep.mubr.f32.mxu0 0.0
        %2006 = vmatmul.mubr.f32.gmra.mxu0 %v1939
        %v2007 = vpop.f32.mrf.mxu0
        %v2008 = vadd.f32 %v1935, %v2007
        %v2009 = vpop.f32.mrf.mxu0
        %2010 = vdwg.mxu0
        %v2011 = vadd.f32 %v2008, %v1836
        %v2012 = vld [vmem:[%s15] sm:$0x1]
        %v2013 = vld [vmem:[%s16] sm:$0x1]
        %v2014 = vsel %vm594, %v2011, 0.0
        %2015 = vadd.xlane.f32.xlu0 %v2014
        %v2016 = vpop.xlane.xlu0 %2015
        %v2017 = vmul.f32 %v2016, %v1812
        %v2018 = vsub.f32 %v2011, %v2017
        %v2019 = vmul.f32 %v2018, %v2018
        %v2020 = vsel %vm594, %v2019, 0.0
        %2021 = vadd.xlane.f32.xlu0 %v2020
        %v2022 = vpop.xlane.xlu0 %2021
        %v2023 = vmul.f32 %v2022, %v1812
        %v2024 = vadd.f32 %v2023, 1e-05
        %v2025 = vrsqrt.pop %v2024
        %v2026 = vmul.f32 %v2018, %v2025
        %v2028 = vlaneseq
        %v2029 = vshrl.u32 %v2028, 7
        %v2030 = vsub.s32 0, %v2029
        %v2031 = vrot.slane %v2012, %v2030
        %v2033 = vmul.f32 %v2026, %v2031
        %v2035 = vlaneseq
        %v2036 = vshrl.u32 %v2035, 7
        %v2037 = vsub.s32 0, %v2036
        %v2038 = vrot.slane %v2013, %v2037
        %v2040 = vadd.f32 %v2033, %v2038
        %2041 = vst.msk [vmem:[%s570] sm:$0xff] %vm594, %v2040
        %s2042 = sand.u32 %s406, 1
        %s2043 = scalar_lea.sflag [#allocation3], %s2042
        %s2044 = sand.u32 %s406, 1
        %s2045 = smul.addr %s2044, 8
        %s2046 = scalar_lea.vmem [#allocation2], %s2045
        %s2047 = sand.u32 %s432, 1
        %s2048 = scalar_lea.sflag [#allocation5], %s2047
        %s2049 = sand.u32 %s432, 1
        %s2050 = smul.addr %s2049, 32
        %s2051 = scalar_lea.vmem [#allocation4], %s2050
        // Predicated region
        $region89: #{_lambda_.1} parent=87 // pred_check
          %p2052 = pneg %p416
        $region90: #{_lambda_.1} parent=87 // pred_check_branch
          %2054 = sbr.rel (%p2052) target = $region92
        $region91: #{_lambda_.1} parent=87 // pred_region
          %s2056 = ssub.s32 128, 128
          %2057 = vsyncadd %s2043, %s2056
          %s2058 = smul.addr %s36, 128
          %s2059 = scalar_lea.hbm %s17, %s2058
          %s2061 = sshll.u32 %s2046, 4
          %s2062 = int_to_ptr.vmem [resolvable:$true] %s2061
          %2064 = dma.vmem_to_hbm [thread:$0]  %s2062, 128, %s2059, %s2043
        $region92: #{_lambda_.1} parent=87 // pred_fallthru
          _
        // Predicated region
        $region93: #{_lambda_.1} parent=87 // pred_check
          %p2065 = pneg %p442
        $region94: #{_lambda_.1} parent=87 // pred_check_branch
          %2067 = sbr.rel (%p2065) target = $region96
        $region95: #{_lambda_.1} parent=87 // pred_region
          %s2069 = ssub.s32 512, 512
          %2070 = vsyncadd %s2048, %s2069
          %s2071 = smul.addr %s36, 128
          %s2072 = scalar_lea.hbm %s18, %s2071
          %s2073 = sshll.u32 %s2051, 4
          %s2074 = int_to_ptr.vmem [resolvable:$true] %s2073
          %2079 = dma.vmem_to_hbm [thread:$0]  %s2074, 512, %s2072, %s2048, 128, 256, 8
        $region96: #{_lambda_.1} parent=87 // pred_fallthru
          _
      $region88: #{_lambda_.1} parent=5 // pred_fallthru
        _
      %p2080 = scmp.le.s32.totalorder 2, %s31
      // Predicated region
      $region97: #{_lambda_.1} parent=5 // pred_check
        %p2081 = pneg %p2080
      $region98: #{_lambda_.1} parent=5 // pred_check_branch
        %2083 = sbr.rel (%p2081) target = $region100
      $region99: #{_lambda_.1} parent=5 // pred_region
        %s2084 = ssub.s32 %s31, 2
        // Predicated region
        $region101: #{_lambda_.1} parent=99 // pred_check
          %p2085 = pneg %p422
        $region102: #{_lambda_.1} parent=99 // pred_check_branch
          %2087 = sbr.rel (%p2085) target = $region104
        $region103: #{_lambda_.1} parent=99 // pred_region
          %s2088 = sand.u32 %s407, 1
          %s2089 = scalar_lea.sflag [#allocation3], %s2088
          %s2090 = sand.u32 %s407, 1
          %s2091 = smul.addr %s2090, 8
          %s2092 = scalar_lea.vmem [#allocation2], %s2091
          %2093 = dma.done %s2089, 128
        $region104: #{_lambda_.1} parent=99 // pred_fallthru
          _
        // Predicated region
        $region105: #{_lambda_.1} parent=99 // pred_check
          %p2094 = pneg %p448
        $region106: #{_lambda_.1} parent=99 // pred_check_branch
          %2096 = sbr.rel (%p2094) target = $region108
        $region107: #{_lambda_.1} parent=99 // pred_region
          %s2097 = sand.u32 %s433, 1
          %s2098 = scalar_lea.sflag [#allocation5], %s2097
          %s2099 = sand.u32 %s433, 1
          %s2100 = smul.addr %s2099, 32
          %s2101 = scalar_lea.vmem [#allocation4], %s2100
          %2102 = dma.done %s2098, 512
        $region108: #{_lambda_.1} parent=99 // pred_fallthru
          _
      $region100: #{_lambda_.1} parent=5 // pred_fallthru
        _
    $region6: #{_lambda_.1} parent=1 // loop_footer
      %s35 = sadd.s32 1, %s31
    $region7: #{_lambda_.1} parent=1 // loop_footer_branch
      %30 = sbr.rel target = $region3
    $region8: #{_lambda_.1} parent=1 // loop_exit
      _
    %2103 = vsyncpa [#allocation3], 1
    %s2104 = scalar_lea.sflag [#allocation3], 1
    %2105 = vsyncpa %s2104, 1
    %2106 = vsyncpa [#allocation5], 1
    %s2107 = scalar_lea.sflag [#allocation5], 1
    %2108 = vsyncpa %s2107, 1

</llo_original>
